<compile_context>
chip_gen: v7x
topology: tpu7x:2x2x1
jax: 0.10.0
libtpu: 0.0.40
codegen_flags: <defaults>
</compile_context>

<pallas_src>
import jax
import jax.numpy as jnp
from jax.experimental import pallas as pl
from jax.experimental.pallas import tpu as pltpu


def _round_up(x, m):
    return (x + m - 1) // m * m


def _pad2d(a, rows, cols):
    return jnp.pad(a, ((0, rows - a.shape[0]), (0, cols - a.shape[1])))


# ------------------------- per-generation configuration ---------------------

def _vmem_capacity_bytes():
    try:
        info = pltpu.get_tpu_info()
        for attr in ("vmem_capacity_bytes", "vmem_size_bytes", "vmem_bytes"):
            v = getattr(info, attr, None)
            if v:
                return int(v)
    except Exception:
        pass
    return 64 * 1024 * 1024  # conservative (v7x-sized) default


def _generation_config():
    """VMEM budget + M-tile target, per TPU generation."""
    vmem = _vmem_capacity_bytes()
    if vmem >= 128 * 1024 * 1024:
        # v4 / v5e / v6e: 128 MiB VMEM per core.
        return {"vmem_limit": 100 * 1024 * 1024, "tm_target": 1024}
    # v7x: 64 MiB physical -> leave ~8 MiB headroom for Mosaic scratch.
    return {"vmem_limit": 56 * 1024 * 1024, "tm_target": 512}


def _fit_tm(tm, Dp, Hp, tn, vmem_limit):
    """Shrink tm until the fused-head working set fits the VMEM budget."""
    budget = int(vmem_limit * 0.85)
    while tm > 256:
        fp = (2 * tm * Dp * 2           # x tile, double-buffered bf16
              + Dp * Hp * 2             # w1 (single-buffered) bf16
              + 2 * Hp * tn * 2         # w2 tile, double-buffered bf16
              + 2 * tm * tn * 4         # output tile, double-buffered f32
              + tm * Hp * 2             # hidden scratch bf16
              + tm * min(Hp, 512) * 4)  # chunked f32 first-layer accumulator
        if fp <= budget:
            break
        tm //= 2
    return tm


def _block_spec(shape, index_map, *, single_buffer=False):
    """BlockSpec; optionally single-buffered for grid-invariant operands."""
    if single_buffer and hasattr(pl, "Buffered"):
        return pl.BlockSpec(shape, index_map, pipeline_mode=pl.Buffered(1))
    return pl.BlockSpec(shape, index_map)


# ----------------------------- Pallas kernels ------------------------------

def _fused_qheads_kernel(x_ref, w1_ref, b1_ref, w2_ref, b2_ref, o_ref, h_ref):
    """Grid (head h, M-tile i, vocab-tile j), j innermost.

    x_ref : (tm, Dp)    bf16  block (i, 0)    -- resident across the vocab sweep
    w1_ref: (1, Dp, Hp) bf16  block (h, 0, 0) -- resident for a whole head (Buffered(1))
    b1_ref: (1, 1, Hp)  f32   block (h, 0, 0)
    w2_ref: (1, Hp, tn) bf16  block (h, 0, j)
    b2_ref: (1, 1, tn)  f32   block (h, 0, j)
    o_ref : (1, tm, tn) f32   block (h, i, j)
    h_ref : (tm, Hp)    bf16  VMEM scratch: ReLU hidden, cached across the j sweep
    """
    j = pl.program_id(2)

    @pl.when(j == 0)
    def _():
        # First layer once per (head, M-tile).  Chunk over Hp so the f32
        # accumulator peak is tm*chunk*4 bytes, not tm*Hp*4.
        Hp = h_ref.shape[1]
        chunk = 512 if (Hp > 512 and Hp % 512 == 0) else Hp
        for c0 in range(0, Hp, chunk):
            acc = jnp.dot(x_ref[...], w1_ref[0, :, c0:c0 + chunk],
                          preferred_element_type=jnp.float32)
            h_ref[:, c0:c0 + chunk] = jnp.maximum(
                acc + b1_ref[0, :, c0:c0 + chunk], 0.0).astype(h_ref.dtype)

    out = jnp.dot(h_ref[...], w2_ref[0], preferred_element_type=jnp.float32)
    o_ref[0] = (out + b2_ref[0]).astype(o_ref.dtype)


def _v_head_kernel(x_ref, w1_ref, b1_ref, w2_ref, b2_ref, o_ref):
    """Grid (M-tile i,). Output padded to 128 lanes (real v value = column 0)."""
    h = jnp.maximum(
        jnp.dot(x_ref[...], w1_ref[...], preferred_element_type=jnp.float32)
        + b1_ref[...], 0.0)
    out = jnp.dot(h.astype(w2_ref.dtype), w2_ref[...],
                  preferred_element_type=jnp.float32)
    o_ref[...] = (out + b2_ref[...]).astype(o_ref.dtype)


def _lm_head_kernel(x_ref, w_ref, o_ref):
    """Grid (vocab-tile j, M-tile i); i innermost so the weight tile stays resident."""
    o_ref[...] = jnp.dot(x_ref[...], w_ref[...],
                         preferred_element_type=jnp.float32).astype(o_ref.dtype)


# ------------------------------ call wrappers -------------------------------

def _fused_q_heads_call(x, w1s, b1s, w2s, b2s, *, tm, tn, vmem_limit,
                        single_buffer):
    Mp, Dp = x.shape
    NH, _, Hp = w1s.shape
    Vp = w2s.shape[2]
    grid = (NH, Mp // tm, Vp // tn)
    m_tiles = Mp // tm
    cost = pl.CostEstimate(
        flops=2 * NH * Mp * (Dp * Hp + Hp * Vp),
        transcendentals=0,
        # x is streamed once per head; w2/b2 are re-streamed once per M-tile.
        bytes_accessed=(NH * x.size * 2 + w1s.size * 2 + b1s.size * 4
                        + m_tiles * (w2s.size * 2 + b2s.size * 4)
                        + NH * Mp * Vp * 4))
    return pl.pallas_call(
        _fused_qheads_kernel,
        out_shape=jax.ShapeDtypeStruct((NH, Mp, Vp), jnp.float32),
        grid_spec=pltpu.PrefetchScalarGridSpec(
            num_scalar_prefetch=0,
            grid=grid,
            in_specs=[
                pl.BlockSpec((tm, Dp), lambda h, i, j: (i, 0)),
                _block_spec((1, Dp, Hp), lambda h, i, j: (h, 0, 0),
                            single_buffer=single_buffer),
                _block_spec((1, 1, Hp), lambda h, i, j: (h, 0, 0),
                            single_buffer=single_buffer),
                pl.BlockSpec((1, Hp, tn), lambda h, i, j: (h, 0, j)),
                pl.BlockSpec((1, 1, tn), lambda h, i, j: (h, 0, j)),
            ],
            out_specs=pl.BlockSpec((1, tm, tn), lambda h, i, j: (h, i, j)),
            scratch_shapes=[pltpu.VMEM((tm, Hp), jnp.bfloat16)],
        ),
        compiler_params=pltpu.CompilerParams(
            dimension_semantics=("parallel", "parallel", "arbitrary"),
            vmem_limit_bytes=vmem_limit),
        cost_estimate=cost,
    )(x, w1s, b1s, w2s, b2s)


def fused_q_heads(x, w1s, b1s, w2s, b2s, *, tm, tn, vmem_limit):
    """All vocab-sized heads in a single launch.

    x:[Mp,Dp] bf16, w1s:[NH,Dp,Hp] bf16, b1s:[NH,1,Hp] f32,
    w2s:[NH,Hp,Vp] bf16, b2s:[NH,1,Vp] f32  ->  [NH,Mp,Vp] f32
    """
    try:
        return _fused_q_heads_call(x, w1s, b1s, w2s, b2s, tm=tm, tn=tn,
                                   vmem_limit=vmem_limit, single_buffer=True)
    except Exception:
        # pl.Buffered(1) rejected on this jax/Mosaic build -> fall back to
        # default double-buffering (more VMEM, always valid).
        return _fused_q_heads_call(x, w1s, b1s, w2s, b2s, tm=tm, tn=tn,
                                   vmem_limit=vmem_limit, single_buffer=False)


def _v_head_call(x, w1, b1, w2, b2, *, tm, vmem_limit, single_buffer):
    Mp, Dp = x.shape
    Hp = w1.shape[1]
    Op = w2.shape[1]  # 128
    cost = pl.CostEstimate(
        flops=2 * Mp * (Dp * Hp + Hp * Op),
        transcendentals=0,
        bytes_accessed=(x.size * 2 + w1.size * 2 + w2.size * 2
                        + b1.size * 4 + b2.size * 4 + Mp * Op * 4))
    return pl.pallas_call(
        _v_head_kernel,
        out_shape=jax.ShapeDtypeStruct((Mp, Op), jnp.float32),
        grid_spec=pltpu.PrefetchScalarGridSpec(
            num_scalar_prefetch=0,
            grid=(Mp // tm,),
            in_specs=[
                pl.BlockSpec((tm, Dp), lambda i: (i, 0)),
                _block_spec((Dp, Hp), lambda i: (0, 0), single_buffer=single_buffer),
                _block_spec((1, Hp), lambda i: (0, 0), single_buffer=single_buffer),
                _block_spec((Hp, Op), lambda i: (0, 0), single_buffer=single_buffer),
                _block_spec((1, Op), lambda i: (0, 0), single_buffer=single_buffer),
            ],
            out_specs=pl.BlockSpec((tm, Op), lambda i: (i, 0)),
        ),
        compiler_params=pltpu.CompilerParams(
            dimension_semantics=("parallel",),
            vmem_limit_bytes=vmem_limit),
        cost_estimate=cost,
    )(x, w1, b1, w2, b2)


def v_head_mlp(x, w1, b1, w2, b2, *, tm, vmem_limit):
    """Linear(D,2D)->ReLU->Linear(2D,1) with the output padded to 128 lanes."""
    try:
        return _v_head_call(x, w1, b1, w2, b2, tm=tm, vmem_limit=vmem_limit,
                            single_buffer=True)
    except Exception:
        return _v_head_call(x, w1, b1, w2, b2, tm=tm, vmem_limit=vmem_limit,
                            single_buffer=False)


def lm_head_matmul(x, w, *, tm, tn, vmem_limit):
    """lm_head: x:[Mp,Dp] bf16 @ w:[Dp,Vp] bf16 -> [Mp,Vp] f32 (no bias)."""
    Mp, Dp = x.shape
    Vp = w.shape[1]
    grid = (Vp // tn, Mp // tm)  # M innermost: weight tile reused across M sweep
    v_tiles = Vp // tn
    cost = pl.CostEstimate(
        flops=2 * Mp * Dp * Vp, transcendentals=0,
        # x is re-streamed once per vocab tile; weights once.
        bytes_accessed=v_tiles * x.size * 2 + w.size * 2 + Mp * Vp * 4)
    return pl.pallas_call(
        _lm_head_kernel,
        out_shape=jax.ShapeDtypeStruct((Mp, Vp), jnp.float32),
        grid_spec=pltpu.PrefetchScalarGridSpec(
            num_scalar_prefetch=0,
            grid=grid,
            in_specs=[
                pl.BlockSpec((tm, Dp), lambda j, i: (i, 0)),
                pl.BlockSpec((Dp, tn), lambda j, i: (0, j)),
            ],
            out_specs=pl.BlockSpec((tm, tn), lambda j, i: (i, j)),
        ),
        compiler_params=pltpu.CompilerParams(
            dimension_semantics=("parallel", "parallel"),
            vmem_limit_bytes=vmem_limit),
        cost_estimate=cost,
    )(x, w)


# --------------------------- parameter construction -------------------------

def _linear_params(key, fan_in, fan_out):
    """PyTorch nn.Linear default init: U(-1/sqrt(fan_in), 1/sqrt(fan_in)).
    Weight is stored [in, out] so kernels can do x @ W directly."""
    kw, kb = jax.random.split(key)
    bound = 1.0 / jnp.sqrt(jnp.float32(fan_in))
    w = jax.random.uniform(kw, (fan_in, fan_out), jnp.float32, -bound, bound)
    b = jax.random.uniform(kb, (1, fan_out), jnp.float32, -bound, bound)
    return w, b


def make_head_params(key, n_embd, out):
    """make_head(n_embd, out): Linear(D, 2D) -> ReLU -> Linear(2D, out)."""
    k1, k2 = jax.random.split(key)
    w1, b1 = _linear_params(k1, n_embd, 2 * n_embd)
    w2, b2 = _linear_params(k2, 2 * n_embd, out)
    return (w1, b1, w2, b2)


class QVModelPallas:
    """Pallas re-implementation of QVModel.forward head compute."""

    def __init__(self, n_embd, vocab_size, two_qs=True, seed=0):
        self.n_embd = n_embd
        self.vocab_size = vocab_size
        self.two_qs = two_qs

        cfg = _generation_config()
        self._vmem_limit = cfg["vmem_limit"]
        self._tm_target = cfg["tm_target"]

        key = jax.random.PRNGKey(seed)
        k_v, k_q1, k_q2, k_lm = jax.random.split(key, 4)
        self.v_head = make_head_params(k_v, n_embd, 1)
        self.q1_head = make_head_params(k_q1, n_embd, vocab_size)
        # target heads are deepcopies of the q heads at init (identical params)
        self.target_q1_head = tuple(p.copy() for p in self.q1_head)
        if two_qs:
            self.q2_head = make_head_params(k_q2, n_embd, vocab_size)
            self.target_q2_head = tuple(p.copy() for p in self.q2_head)
        bound = 1.0 / jnp.sqrt(jnp.float32(n_embd))
        self.lm_head_w = jax.random.uniform(
            k_lm, (n_embd, vocab_size), jnp.float32, -bound, bound)

        # ---- padded / bf16 / stacked kernel-side copies (packed once) ----
        self.Dp = _round_up(n_embd, 128)
        self.Hp = _round_up(2 * n_embd, 128)

        vp128 = _round_up(vocab_size, 128)
        if vp128 >= 1024:
            # Large vocab: pad to 1024 so both tn choices divide Vp.
            self.Vp = _round_up(vp128, 1024)
            self.tn_q = 512       # fused heads: HBM-bound on w2 -> moderate tn
            self.tn_lm = 1024     # lm head: x re-streamed per vocab tile -> wide tn
        else:
            self.Vp = vp128
            self.tn_q = 512 if vp128 % 512 == 0 else vp128
            self.tn_lm = vp128

        if two_qs:
            q_heads = (self.q1_head, self.q2_head,
                       self.target_q1_head, self.target_q2_head)
        else:
            q_heads = (self.q1_head, self.target_q1_head)
        packed = [self._pack_head(h, self.Vp) for h in q_heads]
        self._w1s = jnp.stack([p[0] for p in packed])   # [NH, Dp, Hp] bf16
        self._b1s = jnp.stack([p[1] for p in packed])   # [NH, 1, Hp]  f32
        self._w2s = jnp.stack([p[2] for p in packed])   # [NH, Hp, Vp] bf16
        self._b2s = jnp.stack([p[3] for p in packed])   # [NH, 1, Vp]  f32

        # v head: output column padded 1 -> 128 so stores are lane-dense
        self._v_packed = self._pack_head(self.v_head, 128)

        self._lm_w = _pad2d(self.lm_head_w, self.Dp, self.Vp).astype(jnp.bfloat16)

    def _pack_head(self, head, out_pad):
        w1, b1, w2, b2 = head
        return (_pad2d(w1, self.Dp, self.Hp).astype(jnp.bfloat16),
                _pad2d(b1, 1, self.Hp),
                _pad2d(w2, self.Hp, out_pad).astype(jnp.bfloat16),
                _pad2d(b2, 1, out_pad))

    def forward(self, hs):
        """hs: [B, T, D] last_hidden_state from the (external) transformer.

        Returns QVOutput-like tuple: (logits, qs, target_qs, vs, past_key_values)
        """
        B, T, D = hs.shape
        assert D == self.n_embd
        M = B * T
        V = self.vocab_size

        tm = self._tm_target if M >= self._tm_target else _round_up(M, 8)
        tm = _fit_tm(tm, self.Dp, self.Hp, self.tn_q, self._vmem_limit)
        Mp = _round_up(M, tm)

        x = hs.reshape(M, D)
        xp = _pad2d(x, Mp, self.Dp).astype(jnp.bfloat16)

        q_all = fused_q_heads(xp, self._w1s, self._b1s, self._w2s, self._b2s,
                              tm=tm, tn=self.tn_q,
                              vmem_limit=self._vmem_limit)        # [NH, Mp, Vp]
        logits_p = lm_head_matmul(xp, self._lm_w, tm=tm, tn=self.tn_lm,
                                  vmem_limit=self._vmem_limit)
        v_p = v_head_mlp(xp, *self._v_packed, tm=tm,
                         vmem_limit=self._vmem_limit)

        def unpack(a):  # strip M / vocab padding
            return a[:M, :V].reshape(B, T, V)

        logits = unpack(logits_p)
        vs = v_p[:M, :1].reshape(B, T, 1)
        if self.two_qs:
            qs = (unpack(q_all[0]), unpack(q_all[1]))
            target_qs = (unpack(q_all[2]), unpack(q_all[3]))
        else:
            qs = unpack(q_all[0])
            target_qs = unpack(q_all[1])

        past_key_values = None  # TODO(synk): no transformer backbone / KV cache here
        return (logits, qs, target_qs, vs, past_key_values)


# ------------------------------ reference check -----------------------------

def _bf16(a):
    return a.astype(jnp.bfloat16).astype(jnp.float32)


def _ref_mlp_head(x, w1, b1, w2, b2):
    # emulate bf16 MXU operands with f32 accumulation / epilogue
    h = jnp.maximum(_bf16(x) @ _bf16(w1) + b1, 0.0)
    return _bf16(h) @ _bf16(w2) + b2


def _ref_lm(x, w):
    return _bf16(x) @ _bf16(w)


if __name__ == "__main__":
    # Small shapes that still exercise M / embed / vocab padding paths.
    B, T, D, V = 2, 7, 32, 200
    key = jax.random.PRNGKey(0)
    hs = jax.random.normal(key, (B, T, D), jnp.float32)

    model = QVModelPallas(n_embd=D, vocab_size=V, two_qs=True, seed=0)
    logits, qs, target_qs, vs, pkv = model.forward(hs)
    jax.block_until_ready((logits, qs, target_qs, vs))

    x = hs.reshape(B * T, D)
    ref_q1 = _ref_mlp_head(x, *model.q1_head).reshape(B, T, V)
    ref_q2 = _ref_mlp_head(x, *model.q2_head).reshape(B, T, V)
    ref_logits = _ref_lm(x, model.lm_head_w).reshape(B, T, V)
    ref_vs = _ref_mlp_head(x, *model.v_head).reshape(B, T, 1)

    assert logits.shape == (B, T, V) and vs.shape == (B, T, 1)
    assert qs[0].shape == (B, T, V) and target_qs[1].shape == (B, T, V)
    assert jnp.allclose(qs[0], ref_q1, atol=1e-2, rtol=1e-2)
    assert jnp.allclose(qs[1], ref_q2, atol=1e-2, rtol=1e-2)
    assert jnp.allclose(qs[0], target_qs[0], atol=1e-6)  # deepcopy at init
    assert jnp.allclose(qs[1], target_qs[1], atol=1e-6)
    assert jnp.allclose(logits, ref_logits, atol=1e-2, rtol=1e-2)
    assert jnp.allclose(vs, ref_vs, atol=1e-2, rtol=1e-2)

    print("KERNEL_OK")
</pallas_src>

<mosaic_0001>
module attributes {stable_mosaic.version = 11 : i64} {
  func.func @_fused_qheads_kernel(%arg0: i32, %arg1: i32, %arg2: i32, %arg3: memref<16x128xbf16, #tpu.memory_space<vmem>>, %arg4: memref<1x128x128xbf16, #tpu.memory_space<vmem>>, %arg5: memref<1x1x128xf32, #tpu.memory_space<vmem>>, %arg6: memref<1x128x256xbf16, #tpu.memory_space<vmem>>, %arg7: memref<1x1x256xf32, #tpu.memory_space<vmem>>, %arg8: memref<1x16x256xf32, #tpu.memory_space<vmem>>, %arg9: memref<16x128xbf16, #tpu.memory_space<vmem>>) attributes {dimension_semantics = [#tpu.dimension_semantics<parallel>, #tpu.dimension_semantics<parallel>, #tpu.dimension_semantics<arbitrary>], iteration_bounds = array<i64: 4, 1, 1>, scalar_prefetch = 0 : i64, scratch_operands = 1 : i64, tpu.core_type = #tpu.core_type<tc>, window_params = [{transform_indices = @transform_0, window_bounds = array<i64: 16, 128>}, {pipeline_mode = #tpu.pipeline_mode<synchronous>, transform_indices = @transform_1, window_bounds = array<i64: 1, 128, 128>}, {pipeline_mode = #tpu.pipeline_mode<synchronous>, transform_indices = @transform_2, window_bounds = array<i64: 1, 1, 128>}, {transform_indices = @transform_3, window_bounds = array<i64: 1, 128, 256>}, {transform_indices = @transform_4, window_bounds = array<i64: 1, 1, 256>}, {transform_indices = @transform_5, window_bounds = array<i64: 1, 16, 256>}]} {
    %c0_i32 = arith.constant 0 : i32
    %0 = arith.cmpi eq, %arg2, %c0_i32 : i32
    %1 = arith.extui %0 : i1 to i32
    %c0_i32_0 = arith.constant 0 : i32
    %2 = arith.cmpi ne, %1, %c0_i32_0 : i32
    scf.if %2 {
      %c0_11 = arith.constant 0 : index
      %c0_12 = arith.constant 0 : index
      %14 = vector.load %arg3[%c0_11, %c0_12] : memref<16x128xbf16, #tpu.memory_space<vmem>>, vector<16x128xbf16>
      %c0_13 = arith.constant 0 : index
      %c0_14 = arith.constant 0 : index
      %c0_15 = arith.constant 0 : index
      %15 = vector.load %arg4[%c0_13, %c0_14, %c0_15] : memref<1x128x128xbf16, #tpu.memory_space<vmem>>, vector<1x128x128xbf16>
      %16 = vector.shape_cast %15 : vector<1x128x128xbf16> to vector<128x128xbf16>
      %cst_16 = arith.constant dense<0.000000e+00> : vector<16x128xf32>
      %17 = tpu.matmul %14, %16, %cst_16 {dimension_numbers = #tpu.dot_dimension_numbers<[1], [0], [0], [1], [0, 0, 1, 1], [], []>} : vector<16x128xbf16>, vector<128x128xbf16>, vector<16x128xf32> -> vector<16x128xf32>
      %c0_17 = arith.constant 0 : index
      %c0_18 = arith.constant 0 : index
      %c0_19 = arith.constant 0 : index
      %18 = vector.load %arg5[%c0_17, %c0_18, %c0_19] : memref<1x1x128xf32, #tpu.memory_space<vmem>>, vector<1x1x128xf32>
      %19 = vector.shape_cast %18 : vector<1x1x128xf32> to vector<1x128xf32>
      %20 = vector.broadcast %19 : vector<1x128xf32> to vector<16x128xf32>
      %21 = arith.addf %17, %20 : vector<16x128xf32>
      %cst_20 = arith.constant 0.000000e+00 : f32
      %22 = vector.broadcast %cst_20 : f32 to vector<16x128xf32>
      %23 = arith.maximumf %21, %22 : vector<16x128xf32>
      %24 = arith.truncf %23 : vector<16x128xf32> to vector<16x128xbf16>
      %c0_21 = arith.constant 0 : index
      %c0_22 = arith.constant 0 : index
      %25 = vector.load %arg9[%c0_21, %c0_22] : memref<16x128xbf16, #tpu.memory_space<vmem>>, vector<16x128xbf16>
      tpu.vector_store %arg9[%c0_21, %c0_22], %24 {strides = array<i32>} : memref<16x128xbf16, #tpu.memory_space<vmem>>, vector<16x128xbf16>,
    } else {
    }
    %c0 = arith.constant 0 : index
    %c0_1 = arith.constant 0 : index
    %3 = vector.load %arg9[%c0, %c0_1] : memref<16x128xbf16, #tpu.memory_space<vmem>>, vector<16x128xbf16>
    %c0_2 = arith.constant 0 : index
    %c0_3 = arith.constant 0 : index
    %c0_4 = arith.constant 0 : index
    %4 = vector.load %arg6[%c0_2, %c0_3, %c0_4] : memref<1x128x256xbf16, #tpu.memory_space<vmem>>, vector<1x128x256xbf16>
    %5 = vector.shape_cast %4 : vector<1x128x256xbf16> to vector<128x256xbf16>
    %cst = arith.constant dense<0.000000e+00> : vector<16x256xf32>
    %6 = tpu.matmul %3, %5, %cst {dimension_numbers = #tpu.dot_dimension_numbers<[1], [0], [0], [1], [0, 0, 1, 1], [], []>} : vector<16x128xbf16>, vector<128x256xbf16>, vector<16x256xf32> -> vector<16x256xf32>
    %c0_5 = arith.constant 0 : index
    %c0_6 = arith.constant 0 : index
    %c0_7 = arith.constant 0 : index
    %7 = vector.load %arg7[%c0_5, %c0_6, %c0_7] : memref<1x1x256xf32, #tpu.memory_space<vmem>>, vector<1x1x256xf32>
    %8 = vector.shape_cast %7 : vector<1x1x256xf32> to vector<1x256xf32>
    %9 = vector.broadcast %8 : vector<1x256xf32> to vector<16x256xf32>
    %10 = arith.addf %6, %9 : vector<16x256xf32>
    %c0_8 = arith.constant 0 : index
    %c0_9 = arith.constant 0 : index
    %c0_10 = arith.constant 0 : index
    %11 = vector.load %arg8[%c0_8, %c0_9, %c0_10] : memref<1x16x256xf32, #tpu.memory_space<vmem>>, vector<1x16x256xf32>
    %12 = vector.shape_cast %11 : vector<1x16x256xf32> to vector<16x256xf32>
    %13 = vector.shape_cast %10 : vector<16x256xf32> to vector<1x16x256xf32>
    tpu.vector_store %arg8[%c0_8, %c0_9, %c0_10], %13 {strides = array<i32>} : memref<1x16x256xf32, #tpu.memory_space<vmem>>, vector<1x16x256xf32>,
    return
  }
  func.func @transform_0(%arg0: i32, %arg1: i32, %arg2: i32) -> (i32, i32) {
    %c0_i32 = arith.constant 0 : i32
    %c0_i32_0 = arith.constant 0 : i32
    return %arg1, %c0_i32 : i32, i32
  }
  func.func @transform_1(%arg0: i32, %arg1: i32, %arg2: i32) -> (i32, i32, i32) {
    %c0_i32 = arith.constant 0 : i32
    %c0_i32_0 = arith.constant 0 : i32
    %c0_i32_1 = arith.constant 0 : i32
    return %arg0, %c0_i32, %c0_i32_0 : i32, i32, i32
  }
  func.func @transform_2(%arg0: i32, %arg1: i32, %arg2: i32) -> (i32, i32, i32) {
    %c0_i32 = arith.constant 0 : i32
    %c0_i32_0 = arith.constant 0 : i32
    %c0_i32_1 = arith.constant 0 : i32
    return %arg0, %c0_i32, %c0_i32_0 : i32, i32, i32
  }
  func.func @transform_3(%arg0: i32, %arg1: i32, %arg2: i32) -> (i32, i32, i32) {
    %c0_i32 = arith.constant 0 : i32
    %c0_i32_0 = arith.constant 0 : i32
    return %arg0, %c0_i32, %arg2 : i32, i32, i32
  }
  func.func @transform_4(%arg0: i32, %arg1: i32, %arg2: i32) -> (i32, i32, i32) {
    %c0_i32 = arith.constant 0 : i32
    %c0_i32_0 = arith.constant 0 : i32
    return %arg0, %c0_i32, %arg2 : i32, i32, i32
  }
  func.func @transform_5(%arg0: i32, %arg1: i32, %arg2: i32) -> (i32, i32, i32) {
    %c0_i32 = arith.constant 0 : i32
    return %arg0, %arg1, %arg2 : i32, i32, i32
  }
}

module attributes {stable_mosaic.version = 11 : i64} {
  func.func @_fused_qheads_kernel(%arg0: i32, %arg1: i32, %arg2: i32, %arg3: memref<16x128xbf16, #tpu.memory_space<vmem>>, %arg4: memref<1x128x128xbf16, #tpu.memory_space<vmem>>, %arg5: memref<1x1x128xf32, #tpu.memory_space<vmem>>, %arg6: memref<1x128x256xbf16, #tpu.memory_space<vmem>>, %arg7: memref<1x1x256xf32, #tpu.memory_space<vmem>>, %arg8: memref<1x16x256xf32, #tpu.memory_space<vmem>>, %arg9: memref<16x128xbf16, #tpu.memory_space<vmem>>) attributes {dimension_semantics = [#tpu.dimension_semantics<parallel>, #tpu.dimension_semantics<parallel>, #tpu.dimension_semantics<arbitrary>], iteration_bounds = array<i64: 4, 1, 1>, scalar_prefetch = 0 : i64, scratch_operands = 1 : i64, tpu.core_type = #tpu.core_type<tc>, window_params = [{transform_indices = @transform_0, window_bounds = array<i64: 16, 128>}, {transform_indices = @transform_1, window_bounds = array<i64: 1, 128, 128>}, {transform_indices = @transform_2, window_bounds = array<i64: 1, 1, 128>}, {transform_indices = @transform_3, window_bounds = array<i64: 1, 128, 256>}, {transform_indices = @transform_4, window_bounds = array<i64: 1, 1, 256>}, {transform_indices = @transform_5, window_bounds = array<i64: 1, 16, 256>}]} {
    %c0_i32 = arith.constant 0 : i32
    %0 = arith.cmpi eq, %arg2, %c0_i32 : i32
    %1 = arith.extui %0 : i1 to i32
    %c0_i32_0 = arith.constant 0 : i32
    %2 = arith.cmpi ne, %1, %c0_i32_0 : i32
    scf.if %2 {
      %c0_11 = arith.constant 0 : index
      %c0_12 = arith.constant 0 : index
      %14 = vector.load %arg3[%c0_11, %c0_12] : memref<16x128xbf16, #tpu.memory_space<vmem>>, vector<16x128xbf16>
      %c0_13 = arith.constant 0 : index
      %c0_14 = arith.constant 0 : index
      %c0_15 = arith.constant 0 : index
      %15 = vector.load %arg4[%c0_13, %c0_14, %c0_15] : memref<1x128x128xbf16, #tpu.memory_space<vmem>>, vector<1x128x128xbf16>
      %16 = vector.shape_cast %15 : vector<1x128x128xbf16> to vector<128x128xbf16>
      %cst_16 = arith.constant dense<0.000000e+00> : vector<16x128xf32>
      %17 = tpu.matmul %14, %16, %cst_16 {dimension_numbers = #tpu.dot_dimension_numbers<[1], [0], [0], [1], [0, 0, 1, 1], [], []>} : vector<16x128xbf16>, vector<128x128xbf16>, vector<16x128xf32> -> vector<16x128xf32>
      %c0_17 = arith.constant 0 : index
      %c0_18 = arith.constant 0 : index
      %c0_19 = arith.constant 0 : index
      %18 = vector.load %arg5[%c0_17, %c0_18, %c0_19] : memref<1x1x128xf32, #tpu.memory_space<vmem>>, vector<1x1x128xf32>
      %19 = vector.shape_cast %18 : vector<1x1x128xf32> to vector<1x128xf32>
      %20 = vector.broadcast %19 : vector<1x128xf32> to vector<16x128xf32>
      %21 = arith.addf %17, %20 : vector<16x128xf32>
      %cst_20 = arith.constant 0.000000e+00 : f32
      %22 = vector.broadcast %cst_20 : f32 to vector<16x128xf32>
      %23 = arith.maximumf %21, %22 : vector<16x128xf32>
      %24 = arith.truncf %23 : vector<16x128xf32> to vector<16x128xbf16>
      %c0_21 = arith.constant 0 : index
      %c0_22 = arith.constant 0 : index
      %25 = vector.load %arg9[%c0_21, %c0_22] : memref<16x128xbf16, #tpu.memory_space<vmem>>, vector<16x128xbf16>
      tpu.vector_store %arg9[%c0_21, %c0_22], %24 {strides = array<i32>} : memref<16x128xbf16, #tpu.memory_space<vmem>>, vector<16x128xbf16>,
    } else {
    }
    %c0 = arith.constant 0 : index
    %c0_1 = arith.constant 0 : index
    %3 = vector.load %arg9[%c0, %c0_1] : memref<16x128xbf16, #tpu.memory_space<vmem>>, vector<16x128xbf16>
    %c0_2 = arith.constant 0 : index
    %c0_3 = arith.constant 0 : index
    %c0_4 = arith.constant 0 : index
    %4 = vector.load %arg6[%c0_2, %c0_3, %c0_4] : memref<1x128x256xbf16, #tpu.memory_space<vmem>>, vector<1x128x256xbf16>
    %5 = vector.shape_cast %4 : vector<1x128x256xbf16> to vector<128x256xbf16>
    %cst = arith.constant dense<0.000000e+00> : vector<16x256xf32>
    %6 = tpu.matmul %3, %5, %cst {dimension_numbers = #tpu.dot_dimension_numbers<[1], [0], [0], [1], [0, 0, 1, 1], [], []>} : vector<16x128xbf16>, vector<128x256xbf16>, vector<16x256xf32> -> vector<16x256xf32>
    %c0_5 = arith.constant 0 : index
    %c0_6 = arith.constant 0 : index
    %c0_7 = arith.constant 0 : index
    %7 = vector.load %arg7[%c0_5, %c0_6, %c0_7] : memref<1x1x256xf32, #tpu.memory_space<vmem>>, vector<1x1x256xf32>
    %8 = vector.shape_cast %7 : vector<1x1x256xf32> to vector<1x256xf32>
    %9 = vector.broadcast %8 : vector<1x256xf32> to vector<16x256xf32>
    %10 = arith.addf %6, %9 : vector<16x256xf32>
    %c0_8 = arith.constant 0 : index
    %c0_9 = arith.constant 0 : index
    %c0_10 = arith.constant 0 : index
    %11 = vector.load %arg8[%c0_8, %c0_9, %c0_10] : memref<1x16x256xf32, #tpu.memory_space<vmem>>, vector<1x16x256xf32>
    %12 = vector.shape_cast %11 : vector<1x16x256xf32> to vector<16x256xf32>
    %13 = vector.shape_cast %10 : vector<16x256xf32> to vector<1x16x256xf32>
    tpu.vector_store %arg8[%c0_8, %c0_9, %c0_10], %13 {strides = array<i32>} : memref<1x16x256xf32, #tpu.memory_space<vmem>>, vector<1x16x256xf32>,
    return
  }
  func.func @transform_0(%arg0: i32, %arg1: i32, %arg2: i32) -> (i32, i32) {
    %c0_i32 = arith.constant 0 : i32
    %c0_i32_0 = arith.constant 0 : i32
    return %arg1, %c0_i32 : i32, i32
  }
  func.func @transform_1(%arg0: i32, %arg1: i32, %arg2: i32) -> (i32, i32, i32) {
    %c0_i32 = arith.constant 0 : i32
    %c0_i32_0 = arith.constant 0 : i32
    %c0_i32_1 = arith.constant 0 : i32
    return %arg0, %c0_i32, %c0_i32_0 : i32, i32, i32
  }
  func.func @transform_2(%arg0: i32, %arg1: i32, %arg2: i32) -> (i32, i32, i32) {
    %c0_i32 = arith.constant 0 : i32
    %c0_i32_0 = arith.constant 0 : i32
    %c0_i32_1 = arith.constant 0 : i32
    return %arg0, %c0_i32, %c0_i32_0 : i32, i32, i32
  }
  func.func @transform_3(%arg0: i32, %arg1: i32, %arg2: i32) -> (i32, i32, i32) {
    %c0_i32 = arith.constant 0 : i32
    %c0_i32_0 = arith.constant 0 : i32
    return %arg0, %c0_i32, %arg2 : i32, i32, i32
  }
  func.func @transform_4(%arg0: i32, %arg1: i32, %arg2: i32) -> (i32, i32, i32) {
    %c0_i32 = arith.constant 0 : i32
    %c0_i32_0 = arith.constant 0 : i32
    return %arg0, %c0_i32, %arg2 : i32, i32, i32
  }
  func.func @transform_5(%arg0: i32, %arg1: i32, %arg2: i32) -> (i32, i32, i32) {
    %c0_i32 = arith.constant 0 : i32
    return %arg0, %arg1, %arg2 : i32, i32, i32
  }
}

</mosaic_0001>

<llo_original>
// kernel: tpu_custom_call.1
$region0: #{tpu_custom_call.1}
  #allocation0 [shape = 'u32[]', space=smem, size = 0x4, offset = 0x4, fixed_abs, tag = 'smem constant byte address 0x4 - core index']
  #allocation1 [shape = 'u32[144,128]{1,0:T(1,128)}', space=vmem, size = 0x12000, scoped, tag = 'internal scratch']
  #allocation2 [shape = 'bf16[16,128]{1,0:T(16,128)(2,1)}', space=vmem, size = 0x1000, scoped, tag = 'scratch operand']
  %s0 = inlined_call_operand.hbm [shape: bf16[16,128], index: 0, kind: input, shape index: {}]
  %s1 = inlined_call_operand.hbm [shape: bf16[4,128,128], index: 1, kind: input, shape index: {}]
  %s2 = inlined_call_operand.vmem [shape: f32[4,1,128], index: 2, kind: input, shape index: {}]
  %s3 = inlined_call_operand.hbm [shape: bf16[4,128,256], index: 3, kind: input, shape index: {}]
  %s4 = inlined_call_operand.vmem [shape: f32[4,1,256], index: 4, kind: input, shape index: {}]
  %s5 = inlined_call_operand.hbm [shape: f32[4,16,256], index: 5, kind: output, shape index: {}]
  %s6 = sld [smem:[#allocation0]]
  $region69: #{tpu_custom_call.1} parent=0
    _
  %s8 = ssub.s32 1, %s6
  %s9 = scalar_select 0, %s8, %s6
  $region1: #{tpu_custom_call.1} parent=0
    #allocation3 [shape = 'u8[4096]{0}', space=vmem, size = 0x1000, scoped, tag = 'input window, operand 0, single buffered']
    #allocation4 [shape = 's32[2]{0}', space=sflag, size = 0x8, scoped, tag = 'scoped memory for tpu_custom_call.1']
    #allocation5 [shape = 's32[2]{0}', space=sflag, size = 0x8, scoped, tag = 'scoped memory for tpu_custom_call.1']
    #allocation6 [shape = 'u8[32768]{0}', space=vmem, size = 0x8000, scoped, tag = 'input window, operand 1, single buffered']
    #allocation7 [shape = 's32[1]{0}', space=sflag, size = 0x4, scoped, tag = 'scoped memory for tpu_custom_call.1']
    #allocation8 [shape = 'u8[131072]{0}', space=vmem, size = 0x20000, scoped, tag = 'input window, operand 3']
    #allocation9 [shape = 'u8[32768]{0}', space=vmem, size = 0x8000, scoped, tag = 'output window, operand 0']
    %10 = vsyncpa [#allocation4], 0
    %11 = vsyncpa [#allocation7], 0
    %12 = vsyncpa [#allocation5], 0
    %s13 = scalar_lea.sflag [#allocation5], 1
    %14 = vsyncpa %s13, 0
    loop: start=0, step=1, limit=6
    $region2: #{tpu_custom_call.1} parent=1 // loop_pre_header
      _
    $region3: #{tpu_custom_call.1} parent=1 // loop_header
      %s16 = sphi 0, %s20
      %p17 = scmp.ge.s32.totalorder %s16, 6
      %s23 = sphi 0, %s42
      %s24 = sphi 0, %s38
      %s25 = sphi 0, %s34
      %s26 = sphi 0, %s23
      %s27 = sphi 0, %s24
      %s28 = sphi 0, %s25
      %s29 = sphi 0, %s26
      %s30 = sphi 0, %s27
      %s31 = sphi 0, %s28
      %s45 = sphi 0, %s47
      %s48 = sphi 0, %s45
      %s49 = sphi 0, %s48
      %s65 = sphi 0, %s49
      %s71 = sphi 0, %s73
      %s74 = sphi 0, %s71
      %s75 = sphi 0, %s74
      %s91 = sphi 0, %s75
      %s97 = sphi 0, %s99
      %s100 = sphi 0, %s97
      %s101 = sphi 0, %s100
      %s117 = sphi 0, %s101
      %s125 = sphi 0, %s127
      %s128 = sphi 0, %s125
      %s129 = sphi 0, %s128
      %s145 = sphi 0, %s129
      %s153 = sphi 0, %s155
      %s156 = sphi 0, %s153
      %s157 = sphi 0, %s156
      %s173 = sphi 0, %s157
      %s183 = sphi 0, %s185
      %s186 = sphi 0, %s183
      %s187 = sphi 0, %s186
      %s203 = sphi 0, %s187
    $region4: #{tpu_custom_call.1} parent=1 // loop_header_branch
      %19 = sbr.rel (%p17) target = $region8
    $region5: #{tpu_custom_call.1} parent=1 // loop_body
      %s21 = ssub.s32 %s16, 1
      %s22 = ssub.s32 %s16, 2
      %s32 = sadd.s32 1, %s25
      %p33 = scmp.ge.s32.totalorder %s32, 1
      %s34 = scalar_select %p33, 0, %s32
      %s35 = sadd.s32 1, %s24
      %s36 = scalar_select %p33, %s35, %s24
      %p37 = scmp.ge.s32.totalorder %s36, 1
      %s38 = scalar_select %p37, 0, %s36
      %s39 = sadd.s32 1, %s23
      %s40 = scalar_select %p37, %s39, %s23
      %p41 = scmp.ge.s32.totalorder %s40, 4
      %s42 = scalar_select %p41, 0, %s40
      %s43 = ssub.s32 %s24, %s38
      %p44 = scmp.eq.s32.totalorder %s43, 0
      %s46 = sadd.s32 %s45, 1
      %s47 = scalar_select %p44, %s45, %s46
      %p50 = pneg %p44
      %p51 = scmp.eq.s32.totalorder %s16, 3
      %p52 = por %p50, %p51
      %p53 = scmp.ne.s32.totalorder %s45, %s48
      %p54 = scmp.eq.s32.totalorder %s16, 0
      %p55 = por %p53, %p54
      %p56 = scmp.ne.s32.totalorder %s45, %s48
      %p57 = scmp.eq.s32.totalorder %s21, 3
      %p58 = por %p56, %p57
      %p59 = scmp.ne.s32.totalorder %s48, %s49
      %p60 = scmp.eq.s32.totalorder %s21, 0
      %p61 = por %p59, %p60
      %p62 = scmp.ne.s32.totalorder %s48, %s49
      %p63 = scmp.eq.s32.totalorder %s22, 3
      %p64 = por %p62, %p63
      %p66 = scmp.ne.s32.totalorder %s49, %s65
      %p67 = scmp.eq.s32.totalorder %s22, 0
      %p68 = por %p66, %p67
      %s69 = ssub.s32 %s23, %s42
      %p70 = scmp.eq.s32.totalorder %s69, 0
      %s72 = sadd.s32 %s71, 1
      %s73 = scalar_select %p70, %s71, %s72
      %p76 = pneg %p70
      %p77 = scmp.eq.s32.totalorder %s16, 3
      %p78 = por %p76, %p77
      %p79 = scmp.ne.s32.totalorder %s71, %s74
      %p80 = scmp.eq.s32.totalorder %s16, 0
      %p81 = por %p79, %p80
      %p82 = scmp.ne.s32.totalorder %s71, %s74
      %p83 = scmp.eq.s32.totalorder %s21, 3
      %p84 = por %p82, %p83
      %p85 = scmp.ne.s32.totalorder %s74, %s75
      %p86 = scmp.eq.s32.totalorder %s21, 0
      %p87 = por %p85, %p86
      %p88 = scmp.ne.s32.totalorder %s74, %s75
      %p89 = scmp.eq.s32.totalorder %s22, 3
      %p90 = por %p88, %p89
      %p92 = scmp.ne.s32.totalorder %s75, %s91
      %p93 = scmp.eq.s32.totalorder %s22, 0
      %p94 = por %p92, %p93
      %s95 = ssub.s32 %s23, %s42
      %p96 = scmp.eq.s32.totalorder %s95, 0
      %s98 = sadd.s32 %s97, 1
      %s99 = scalar_select %p96, %s97, %s98
      %p102 = pneg %p96
      %p103 = scmp.eq.s32.totalorder %s16, 3
      %p104 = por %p102, %p103
      %p105 = scmp.ne.s32.totalorder %s97, %s100
      %p106 = scmp.eq.s32.totalorder %s16, 0
      %p107 = por %p105, %p106
      %p108 = scmp.ne.s32.totalorder %s97, %s100
      %p109 = scmp.eq.s32.totalorder %s21, 3
      %p110 = por %p108, %p109
      %p111 = scmp.ne.s32.totalorder %s100, %s101
      %p112 = scmp.eq.s32.totalorder %s21, 0
      %p113 = por %p111, %p112
      %p114 = scmp.ne.s32.totalorder %s100, %s101
      %p115 = scmp.eq.s32.totalorder %s22, 3
      %p116 = por %p114, %p115
      %p118 = scmp.ne.s32.totalorder %s101, %s117
      %p119 = scmp.eq.s32.totalorder %s22, 0
      %p120 = por %p118, %p119
      %s121 = ssub.s32 %s23, %s42
      %s122 = ssub.s32 %s25, %s34
      %s123 = sor.u32 %s121, %s122
      %p124 = scmp.eq.s32.totalorder %s123, 0
      %s126 = sadd.s32 %s125, 1
      %s127 = scalar_select %p124, %s125, %s126
      %p130 = pneg %p124
      %p131 = scmp.eq.s32.totalorder %s16, 3
      %p132 = por %p130, %p131
      %p133 = scmp.ne.s32.totalorder %s125, %s128
      %p134 = scmp.eq.s32.totalorder %s16, 0
      %p135 = por %p133, %p134
      %p136 = scmp.ne.s32.totalorder %s125, %s128
      %p137 = scmp.eq.s32.totalorder %s21, 3
      %p138 = por %p136, %p137
      %p139 = scmp.ne.s32.totalorder %s128, %s129
      %p140 = scmp.eq.s32.totalorder %s21, 0
      %p141 = por %p139, %p140
      %p142 = scmp.ne.s32.totalorder %s128, %s129
      %p143 = scmp.eq.s32.totalorder %s22, 3
      %p144 = por %p142, %p143
      %p146 = scmp.ne.s32.totalorder %s129, %s145
      %p147 = scmp.eq.s32.totalorder %s22, 0
      %p148 = por %p146, %p147
      %s149 = ssub.s32 %s23, %s42
      %s150 = ssub.s32 %s25, %s34
      %s151 = sor.u32 %s149, %s150
      %p152 = scmp.eq.s32.totalorder %s151, 0
      %s154 = sadd.s32 %s153, 1
      %s155 = scalar_select %p152, %s153, %s154
      %p158 = pneg %p152
      %p159 = scmp.eq.s32.totalorder %s16, 3
      %p160 = por %p158, %p159
      %p161 = scmp.ne.s32.totalorder %s153, %s156
      %p162 = scmp.eq.s32.totalorder %s16, 0
      %p163 = por %p161, %p162
      %p164 = scmp.ne.s32.totalorder %s153, %s156
      %p165 = scmp.eq.s32.totalorder %s21, 3
      %p166 = por %p164, %p165
      %p167 = scmp.ne.s32.totalorder %s156, %s157
      %p168 = scmp.eq.s32.totalorder %s21, 0
      %p169 = por %p167, %p168
      %p170 = scmp.ne.s32.totalorder %s156, %s157
      %p171 = scmp.eq.s32.totalorder %s22, 3
      %p172 = por %p170, %p171
      %p174 = scmp.ne.s32.totalorder %s157, %s173
      %p175 = scmp.eq.s32.totalorder %s22, 0
      %p176 = por %p174, %p175
      %s177 = ssub.s32 %s23, %s42
      %s178 = ssub.s32 %s24, %s38
      %s179 = sor.u32 %s177, %s178
      %s180 = ssub.s32 %s25, %s34
      %s181 = sor.u32 %s179, %s180
      %p182 = scmp.eq.s32.totalorder %s181, 0
      %s184 = sadd.s32 %s183, 1
      %s185 = scalar_select %p182, %s183, %s184
      %p188 = pneg %p182
      %p189 = scmp.eq.s32.totalorder %s16, 3
      %p190 = por %p188, %p189
      %p191 = scmp.ne.s32.totalorder %s183, %s186
      %p192 = scmp.eq.s32.totalorder %s16, 0
      %p193 = por %p191, %p192
      %p194 = scmp.ne.s32.totalorder %s183, %s186
      %p195 = scmp.eq.s32.totalorder %s21, 3
      %p196 = por %p194, %p195
      %p197 = scmp.ne.s32.totalorder %s186, %s187
      %p198 = scmp.eq.s32.totalorder %s21, 0
      %p199 = por %p197, %p198
      %p200 = scmp.ne.s32.totalorder %s186, %s187
      %p201 = scmp.eq.s32.totalorder %s22, 3
      %p202 = por %p200, %p201
      %p204 = scmp.ne.s32.totalorder %s187, %s203
      %p205 = scmp.eq.s32.totalorder %s22, 0
      %p206 = por %p204, %p205
      %p207 = scmp.le.s32.totalorder 1, %s16
      %p208 = scmp.lt.s32.totalorder %s16, 5
      %p209 = pnand %p207, %p208
      %p210 = pneg %p209
      // Predicated region
      $region9: #{tpu_custom_call.1} parent=5 // pred_check
        _
      $region10: #{tpu_custom_call.1} parent=5 // pred_check_branch
        %212 = sbr.rel (%p209) target = $region12
      $region11: #{tpu_custom_call.1} parent=5 // pred_region
        %s213 = ssub.s32 %s16, 1
        // Predicated region
        $region13: #{tpu_custom_call.1} parent=11 // pred_check
          %p214 = pneg %p61
        $region14: #{tpu_custom_call.1} parent=11 // pred_check_branch
          %216 = sbr.rel (%p214) target = $region16
        $region15: #{tpu_custom_call.1} parent=11 // pred_region
          %s217 = smul.u32 2, %s27
          %s219 = ssub.s32 128, 128
          %220 = vsyncadd [#allocation4], %s219
          %s221 = smul.addr %s217, 64
          %s222 = scalar_lea.hbm %s0, %s221
          %s223 = sshll.u32 [#allocation3], 4
          %s224 = int_to_ptr.vmem [resolvable:$true] %s223
          %229 = dma.hbm_to_vmem [thread:$0]  %s222, 128, %s224, [#allocation4], 64, 64, 4
        $region16: #{tpu_custom_call.1} parent=11 // pred_fallthru
          _
        // Predicated region
        $region17: #{tpu_custom_call.1} parent=11 // pred_check
          %p230 = pneg %p87
        $region18: #{tpu_custom_call.1} parent=11 // pred_check_branch
          %232 = sbr.rel (%p230) target = $region20
        $region19: #{tpu_custom_call.1} parent=11 // pred_region
          %s234 = ssub.s32 1024, 1024
          %235 = vsyncadd [#allocation7], %s234
          %s236 = smul.addr %s26, 16
          %s237 = smul.addr %s236, 64
          %s238 = scalar_lea.hbm %s1, %s237
          %s239 = sshll.u32 [#allocation6], 4
          %s240 = int_to_ptr.vmem [resolvable:$true] %s239
          %245 = dma.hbm_to_vmem [thread:$0]  %s238, 1024, %s240, [#allocation7], 64, 64, 4
        $region20: #{tpu_custom_call.1} parent=11 // pred_fallthru
          _
        // Predicated region
        $region21: #{tpu_custom_call.1} parent=11 // pred_check
          %p246 = pneg %p113
        $region22: #{tpu_custom_call.1} parent=11 // pred_check_branch
          %248 = sbr.rel (%p246) target = $region24
        $region23: #{tpu_custom_call.1} parent=11 // pred_region
          %p249 = scmp.lt.s32.totalorder %s26, 3
          %s250 = scalar_select %p249, %s26, 3
          %s251 = scalar_lea.vmem %s2, %s250
        $region24: #{tpu_custom_call.1} parent=11 // pred_fallthru
          _
      $region12: #{tpu_custom_call.1} parent=5 // pred_fallthru
        _
      %p252 = scmp.lt.s32.totalorder %s16, 4
      // Predicated region
      $region25: #{tpu_custom_call.1} parent=5 // pred_check
        %p253 = pneg %p252
      $region26: #{tpu_custom_call.1} parent=5 // pred_check_branch
        %255 = sbr.rel (%p253) target = $region28
      $region27: #{tpu_custom_call.1} parent=5 // pred_region
        // Predicated region
        $region29: #{tpu_custom_call.1} parent=27 // pred_check
          %p256 = pneg %p135
        $region30: #{tpu_custom_call.1} parent=27 // pred_check_branch
          %258 = sbr.rel (%p256) target = $region32
        $region31: #{tpu_custom_call.1} parent=27 // pred_region
          %s259 = sand.u32 %s16, 1
          %s260 = scalar_lea.sflag [#allocation4], %s259
          %s261 = sand.u32 %s125, 1
          %s262 = smul.addr %s261, 128
          %s263 = scalar_lea.vmem [#allocation8], %s262
          %s264 = smul.u32 2, %s25
          %s266 = ssub.s32 2048, 2048
          %267 = vsyncadd %s260, %s266
          %s268 = smul.addr %s23, 32
          %s269 = sadd.s32 %s264, %s268
          %s270 = smul.addr %s269, 64
          %s271 = scalar_lea.hbm %s3, %s270
          %s272 = sshll.u32 %s263, 4
          %s273 = int_to_ptr.vmem [resolvable:$true] %s272
          %278 = dma.hbm_to_vmem [thread:$0]  %s271, 2048, %s273, %s260, 128, 128, 8
        $region32: #{tpu_custom_call.1} parent=27 // pred_fallthru
          _
        // Predicated region
        $region33: #{tpu_custom_call.1} parent=27 // pred_check
          %p279 = pneg %p163
        $region34: #{tpu_custom_call.1} parent=27 // pred_check_branch
          %281 = sbr.rel (%p279) target = $region36
        $region35: #{tpu_custom_call.1} parent=27 // pred_region
          %s282 = smul.u32 2, %s25
          %p283 = scmp.lt.s32.totalorder %s23, 3
          %s284 = scalar_select %p283, %s23, 3
          %p285 = scmp.lt.s32.totalorder %s282, 1
          %s286 = scalar_select %p285, %s282, 1
          %s287 = smul.addr %s284, 2
          %s288 = sadd.s32 %s286, %s287
          %s289 = scalar_lea.vmem %s4, %s288
          %s290 = smul.u32 2, %s25
        $region36: #{tpu_custom_call.1} parent=27 // pred_fallthru
          _
      $region28: #{tpu_custom_call.1} parent=5 // pred_fallthru
        _
      %p291 = scmp.le.s32.totalorder 1, %s16
      %p292 = scmp.lt.s32.totalorder %s16, 5
      %p293 = pnand %p291, %p292
      %p294 = pneg %p293
      // Predicated region
      $region37: #{tpu_custom_call.1} parent=5 // pred_check
        _
      $region38: #{tpu_custom_call.1} parent=5 // pred_check_branch
        %296 = sbr.rel (%p293) target = $region40
      $region39: #{tpu_custom_call.1} parent=5 // pred_region
        %s297 = ssub.s32 %s16, 1
        // Predicated region
        $region41: #{tpu_custom_call.1} parent=39 // pred_check
          %p298 = pneg %p61
        $region42: #{tpu_custom_call.1} parent=39 // pred_check_branch
          %300 = sbr.rel (%p298) target = $region44
        $region43: #{tpu_custom_call.1} parent=39 // pred_region
          %301 = dma.done [#allocation4], 128
        $region44: #{tpu_custom_call.1} parent=39 // pred_fallthru
          _
        // Predicated region
        $region45: #{tpu_custom_call.1} parent=39 // pred_check
          %p302 = pneg %p87
        $region46: #{tpu_custom_call.1} parent=39 // pred_check_branch
          %304 = sbr.rel (%p302) target = $region48
        $region47: #{tpu_custom_call.1} parent=39 // pred_region
          %305 = dma.done [#allocation7], 1024
        $region48: #{tpu_custom_call.1} parent=39 // pred_fallthru
          _
        %s306 = sand.u32 %s21, 1
        %s307 = scalar_lea.sflag [#allocation4], %s306
        %s308 = sand.u32 %s128, 1
        %s309 = smul.addr %s308, 128
        %s310 = scalar_lea.vmem [#allocation8], %s309
        // Predicated region
        $region49: #{tpu_custom_call.1} parent=39 // pred_check
          %p311 = pneg %p141
        $region50: #{tpu_custom_call.1} parent=39 // pred_check_branch
          %313 = sbr.rel (%p311) target = $region52
        $region51: #{tpu_custom_call.1} parent=39 // pred_region
          %314 = dma.done %s307, 2048
        $region52: #{tpu_custom_call.1} parent=39 // pred_fallthru
          _
        %p315 = pneg %p61
        %p316 = pneg %p58
        %p317 = pneg %p87
        %p318 = pneg %p84
        %p319 = scmp.lt.s32.totalorder %s26, 3
        %s320 = scalar_select %p319, %s26, 3
        %s321 = scalar_lea.vmem %s2, %s320
        %p322 = pneg %p113
        %p323 = pneg %p110
        %s324 = sand.u32 %s21, 1
        %s325 = scalar_lea.sflag [#allocation4], %s324
        %s326 = sand.u32 %s128, 1
        %s327 = smul.addr %s326, 128
        %s328 = scalar_lea.vmem [#allocation8], %s327
        %p329 = pneg %p141
        %p330 = pneg %p138
        %s331 = smul.u32 2, %s28
        %p332 = scmp.lt.s32.totalorder %s26, 3
        %s333 = scalar_select %p332, %s26, 3
        %p334 = scmp.lt.s32.totalorder %s331, 1
        %s335 = scalar_select %p334, %s331, 1
        %s336 = smul.addr %s333, 2
        %s337 = sadd.s32 %s335, %s336
        %s338 = scalar_lea.vmem %s4, %s337
        %p339 = pneg %p169
        %p340 = pneg %p166
        %p341 = pneg %p199
        %p342 = pneg %p196
        %s343 = sand.u32 %s186, 1
        %s344 = scalar_lea.sflag [#allocation5], %s343
        %s345 = sand.u32 %s186, 1
        %s346 = smul.addr %s345, 32
        %s347 = scalar_lea.vmem [#allocation9], %s346
        %s348 = smul.u32 2, %s27
        %p349 = scmp.lt.s32.totalorder %s26, 3
        %s350 = scalar_select %p349, %s26, 3
        %s351 = scalar_lea.vmem %s2, %s350
        %s352 = smul.u32 2, %s28
        %s353 = smul.u32 2, %s28
        %p354 = scmp.lt.s32.totalorder %s26, 3
        %s355 = scalar_select %p354, %s26, 3
        %p356 = scmp.lt.s32.totalorder %s353, 1
        %s357 = scalar_select %p356, %s353, 1
        %s358 = smul.addr %s355, 2
        %s359 = sadd.s32 %s357, %s358
        %s360 = scalar_lea.vmem %s4, %s359
        %s361 = smul.u32 2, %s28
        %s362 = smul.u32 2, %s27
        %s363 = smul.u32 2, %s28
        %p365 = scmp.eq.s32.totalorder %s28, 0
        // Predicated region
        $region53: #{tpu_custom_call.1} parent=39 // pred_check
          %p366 = pneg %p365
        $region54: #{tpu_custom_call.1} parent=39 // pred_check_branch
          %368 = sbr.rel (%p366) target = $region56
        $region55: #{tpu_custom_call.1} parent=39 // pred_region
          %v369 = vld [vmem:[#allocation3] sm:$0xf]
          %v370 = vld [vmem:[#allocation3 + $0x4] sm:$0xf]
          %v371 = vld [vmem:[#allocation6] sm:$0xf]
          %v372 = vld [vmem:[#allocation6 + $0x4] sm:$0xf]
          %v373 = vld [vmem:[#allocation6 + $0x8] sm:$0xf]
          %v374 = vld [vmem:[#allocation6 + $0xc] sm:$0xf]
          %v375 = vld [vmem:[#allocation6 + $0x10] sm:$0xf]
          %v376 = vld [vmem:[#allocation6 + $0x14] sm:$0xf]
          %v377 = vld [vmem:[#allocation6 + $0x18] sm:$0xf]
          %v378 = vld [vmem:[#allocation6 + $0x1c] sm:$0xf]
          %v379 = vld [vmem:[#allocation6 + $0x20] sm:$0xf]
          %v380 = vld [vmem:[#allocation6 + $0x24] sm:$0xf]
          %v381 = vld [vmem:[#allocation6 + $0x28] sm:$0xf]
          %v382 = vld [vmem:[#allocation6 + $0x2c] sm:$0xf]
          %v383 = vld [vmem:[#allocation6 + $0x30] sm:$0xf]
          %v384 = vld [vmem:[#allocation6 + $0x34] sm:$0xf]
          %v385 = vld [vmem:[#allocation6 + $0x38] sm:$0xf]
          %v386 = vld [vmem:[#allocation6 + $0x3c] sm:$0xf]
          %v387 = vld [vmem:[%s351] sm:$0x1]
          %v389 = vlaneseq
          %v390 = vshrl.u32 %v389, 7
          %v391 = vsub.s32 0, %v390
          %v392 = vrot.slane %v387, %v391
          %v396 = vunpack.c.l.b16 %v369
          %v397 = vunpack.c.l.b16 %v370
          %v398 = vpack.c.b16 %v397, %v396
          %v416 = vunpack.c.l.b16 %v371
          %v417 = vunpack.c.l.b16 %v372
          %v418 = vunpack.c.l.b16 %v373
          %v419 = vunpack.c.l.b16 %v374
          %v420 = vunpack.c.l.b16 %v375
          %v421 = vunpack.c.l.b16 %v376
          %v422 = vunpack.c.l.b16 %v377
          %v423 = vunpack.c.l.b16 %v378
          %v424 = vunpack.c.l.b16 %v379
          %v425 = vunpack.c.l.b16 %v380
          %v426 = vunpack.c.l.b16 %v381
          %v427 = vunpack.c.l.b16 %v382
          %v428 = vunpack.c.l.b16 %v383
          %v429 = vunpack.c.l.b16 %v384
          %v430 = vunpack.c.l.b16 %v385
          %v431 = vunpack.c.l.b16 %v386
          %v432 = vpack.c.b16 %v417, %v416
          %v433 = vpack.c.b16 %v419, %v418
          %v434 = vpack.c.b16 %v421, %v420
          %v435 = vpack.c.b16 %v423, %v422
          %v436 = vpack.c.b16 %v425, %v424
          %v437 = vpack.c.b16 %v427, %v426
          %v438 = vpack.c.b16 %v429, %v428
          %v439 = vpack.c.b16 %v431, %v430
          %448 = vmatprep.subr.bf16.mxu0 0
          %449 = vmatpush1.bf16.msra.mxu0 %v432
          %450 = vmatprep.subr.bf16.mxu0 0
          %451 = vmatpush1.bf16.msra.mxu0 %v433
          %452 = vmatprep.subr.bf16.mxu0 0
          %453 = vmatpush1.bf16.msra.mxu0 %v434
          %454 = vmatprep.subr.bf16.mxu0 0
          %455 = vmatpush1.bf16.msra.mxu0 %v435
          %456 = vmatprep.subr.bf16.mxu0 0
          %457 = vmatpush1.bf16.msra.mxu0 %v436
          %458 = vmatprep.subr.bf16.mxu0 0
          %459 = vmatpush1.bf16.msra.mxu0 %v437
          %460 = vmatprep.subr.bf16.mxu0 0
          %461 = vmatpush1.bf16.msra.mxu0 %v438
          %462 = vmatprep.subr.bf16.mxu0 0
          %463 = vmatpush1.bf16.msra.mxu0 %v439
          %464 = vmatprep.subr.bf16.mxu0 0
          %465 = vmatpush1.bf16.msra.mxu0 0
          %466 = vmatprep.subr.bf16.mxu0 0
          %467 = vmatpush1.bf16.msra.mxu0 0
          %468 = vmatprep.subr.bf16.mxu0 0
          %469 = vmatpush1.bf16.msra.mxu0 0
          %470 = vmatprep.subr.bf16.mxu0 0
          %471 = vmatpush1.bf16.msra.mxu0 0
          %472 = vmatprep.subr.bf16.mxu0 0
          %473 = vmatpush1.bf16.msra.mxu0 0
          %474 = vmatprep.subr.bf16.mxu0 0
          %475 = vmatpush1.bf16.msra.mxu0 0
          %476 = vmatprep.subr.bf16.mxu0 0
          %477 = vmatpush1.bf16.msra.mxu0 0
          %478 = vmatprep.subr.bf16.mxu0 0
          %479 = vmatpush1.bf16.msra.mxu0 0
          %480 = vmatprep.mubr.bf16.mxu0 0
          %481 = vmatmul.mubr.bf16.gmra.mrb[0].mxu0 %v398
          %v482 = vpop.f32.mrb[0].mxu0
          %v483 = vadd.f32 %v392, %v482
          %v484 = vpop.f32.mrb[0].mxu0
          %v485 = vpop.f32.mrb[0].mxu0
          %v486 = vadd.f32 %v392, %v485
          %v487 = vpop.f32.mrb[0].mxu0
          %488 = vdwg.mxu0
          %v489 = vmax.f32 %v483, 0.0
          %v490 = vmax.f32 %v486, 0.0
          %v491 = vpack.c.bf16 %v490, %v489
          %492 = vst [vmem:[#allocation2] sm:$0xff] %v491
        $region56: #{tpu_custom_call.1} parent=39 // pred_fallthru
          _
        %v493 = vld [vmem:[#allocation2] sm:$0xff]
        %v494 = vld [vmem:[%s310] sm:$0xff]
        %v495 = vld [vmem:[%s310 + $0x8] sm:$0xff]
        %v496 = vld [vmem:[%s310 + $0x10] sm:$0xff]
        %v497 = vld [vmem:[%s310 + $0x18] sm:$0xff]
        %v498 = vld [vmem:[%s310 + $0x20] sm:$0xff]
        %v499 = vld [vmem:[%s310 + $0x28] sm:$0xff]
        %v500 = vld [vmem:[%s310 + $0x30] sm:$0xff]
        %v501 = vld [vmem:[%s310 + $0x38] sm:$0xff]
        %v502 = vld [vmem:[%s310 + $0x40] sm:$0xff]
        %v503 = vld [vmem:[%s310 + $0x48] sm:$0xff]
        %v504 = vld [vmem:[%s310 + $0x50] sm:$0xff]
        %v505 = vld [vmem:[%s310 + $0x58] sm:$0xff]
        %v506 = vld [vmem:[%s310 + $0x60] sm:$0xff]
        %v507 = vld [vmem:[%s310 + $0x68] sm:$0xff]
        %v508 = vld [vmem:[%s310 + $0x70] sm:$0xff]
        %v509 = vld [vmem:[%s310 + $0x78] sm:$0xff]
        %v510 = vld [vmem:[%s360] sm:$0x3]
        %v512 = vlaneseq
        %v513 = vshrl.u32 %v512, 7
        %v514 = vsub.s32 0, %v513
        %v515 = vrot.slane %v510, %v514
        %v516 = vlaneseq
        %v517 = vshrl.u32 %v516, 7
        %v518 = vsub.s32 1, %v517
        %v519 = vrot.slane %v510, %v518
        %v538 = vunpack.c.l.b16 %v494
        %v539 = vunpack.c.h.b16 %v494
        %v540 = vunpack.c.l.b16 %v495
        %v541 = vunpack.c.h.b16 %v495
        %v542 = vunpack.c.l.b16 %v496
        %v543 = vunpack.c.h.b16 %v496
        %v544 = vunpack.c.l.b16 %v497
        %v545 = vunpack.c.h.b16 %v497
        %v546 = vunpack.c.l.b16 %v498
        %v547 = vunpack.c.h.b16 %v498
        %v548 = vunpack.c.l.b16 %v499
        %v549 = vunpack.c.h.b16 %v499
        %v550 = vunpack.c.l.b16 %v500
        %v551 = vunpack.c.h.b16 %v500
        %v552 = vunpack.c.l.b16 %v501
        %v553 = vunpack.c.h.b16 %v501
        %v554 = vunpack.c.l.b16 %v502
        %v555 = vunpack.c.h.b16 %v502
        %v556 = vunpack.c.l.b16 %v503
        %v557 = vunpack.c.h.b16 %v503
        %v558 = vunpack.c.l.b16 %v504
        %v559 = vunpack.c.h.b16 %v504
        %v560 = vunpack.c.l.b16 %v505
        %v561 = vunpack.c.h.b16 %v505
        %v562 = vunpack.c.l.b16 %v506
        %v563 = vunpack.c.h.b16 %v506
        %v564 = vunpack.c.l.b16 %v507
        %v565 = vunpack.c.h.b16 %v507
        %v566 = vunpack.c.l.b16 %v508
        %v567 = vunpack.c.h.b16 %v508
        %v568 = vunpack.c.l.b16 %v509
        %v569 = vunpack.c.h.b16 %v509
        %v570 = vpack.c.b16 %v540, %v538
        %v571 = vpack.c.b16 %v541, %v539
        %v572 = vpack.c.b16 %v544, %v542
        %v573 = vpack.c.b16 %v545, %v543
        %v574 = vpack.c.b16 %v548, %v546
        %v575 = vpack.c.b16 %v549, %v547
        %v576 = vpack.c.b16 %v552, %v550
        %v577 = vpack.c.b16 %v553, %v551
        %v578 = vpack.c.b16 %v556, %v554
        %v579 = vpack.c.b16 %v557, %v555
        %v580 = vpack.c.b16 %v560, %v558
        %v581 = vpack.c.b16 %v561, %v559
        %v582 = vpack.c.b16 %v564, %v562
        %v583 = vpack.c.b16 %v565, %v563
        %v584 = vpack.c.b16 %v568, %v566
        %v585 = vpack.c.b16 %v569, %v567
        %602 = vmatprep.subr.bf16.mxu0 %v571
        %603 = vmatpush1.bf16.msra.mxu0 %v570
        %604 = vmatprep.subr.bf16.mxu0 %v573
        %605 = vmatpush1.bf16.msra.mxu0 %v572
        %606 = vmatprep.subr.bf16.mxu0 %v575
        %607 = vmatpush1.bf16.msra.mxu0 %v574
        %608 = vmatprep.subr.bf16.mxu0 %v577
        %609 = vmatpush1.bf16.msra.mxu0 %v576
        %610 = vmatprep.subr.bf16.mxu0 %v579
        %611 = vmatpush1.bf16.msra.mxu0 %v578
        %612 = vmatprep.subr.bf16.mxu0 %v581
        %613 = vmatpush1.bf16.msra.mxu0 %v580
        %614 = vmatprep.subr.bf16.mxu0 %v583
        %615 = vmatpush1.bf16.msra.mxu0 %v582
        %616 = vmatprep.subr.bf16.mxu0 %v585
        %617 = vmatpush1.bf16.msra.mxu0 %v584
        %618 = vmatprep.subr.bf16.mxu0 0
        %619 = vmatpush1.bf16.msra.mxu0 0
        %620 = vmatprep.subr.bf16.mxu0 0
        %621 = vmatpush1.bf16.msra.mxu0 0
        %622 = vmatprep.subr.bf16.mxu0 0
        %623 = vmatpush1.bf16.msra.mxu0 0
        %624 = vmatprep.subr.bf16.mxu0 0
        %625 = vmatpush1.bf16.msra.mxu0 0
        %626 = vmatprep.subr.bf16.mxu0 0
        %627 = vmatpush1.bf16.msra.mxu0 0
        %628 = vmatprep.subr.bf16.mxu0 0
        %629 = vmatpush1.bf16.msra.mxu0 0
        %630 = vmatprep.subr.bf16.mxu0 0
        %631 = vmatpush1.bf16.msra.mxu0 0
        %632 = vmatprep.subr.bf16.mxu0 0
        %633 = vmatpush1.bf16.msra.mxu0 0
        %634 = vmatprep.mubr.bf16.mxu0 0
        %635 = vmatmul.mubr.bf16.gmra.mrb[0].mxu0 %v493
        %v636 = vpop.f32.mrb[0].mxu0
        %v637 = vadd.f32 %v515, %v636
        %v638 = vpop.f32.mrb[0].mxu0
        %v639 = vadd.f32 %v519, %v638
        %v640 = vpop.f32.mrb[0].mxu0
        %v641 = vadd.f32 %v515, %v640
        %v642 = vpop.f32.mrb[0].mxu0
        %v643 = vadd.f32 %v519, %v642
        %644 = vdwg.mxu0
        %645 = vst [vmem:[%s347] sm:$0xff] %v637
        %646 = vst [vmem:[%s347 + $0x8] sm:$0xff] %v639
        %647 = vst [vmem:[%s347 + $0x10] sm:$0xff] %v641
        %648 = vst [vmem:[%s347 + $0x18] sm:$0xff] %v643
        %s649 = sand.u32 %s186, 1
        %s650 = scalar_lea.sflag [#allocation5], %s649
        %s651 = sand.u32 %s186, 1
        %s652 = smul.addr %s651, 32
        %s653 = scalar_lea.vmem [#allocation9], %s652
        // Predicated region
        $region57: #{tpu_custom_call.1} parent=39 // pred_check
          %p654 = pneg %p196
        $region58: #{tpu_custom_call.1} parent=39 // pred_check_branch
          %656 = sbr.rel (%p654) target = $region60
        $region59: #{tpu_custom_call.1} parent=39 // pred_region
          %s657 = smul.u32 2, %s27
          %s658 = smul.u32 2, %s28
          %s660 = ssub.s32 512, 512
          %661 = vsyncadd %s650, %s660
          %s662 = smul.addr %s657, 2
          %s663 = sadd.s32 %s658, %s662
          %s664 = smul.addr %s26, 4
          %s665 = sadd.s32 %s663, %s664
          %s666 = smul.addr %s665, 128
          %s667 = scalar_lea.hbm %s5, %s666
          %s668 = sshll.u32 %s653, 4
          %s669 = int_to_ptr.vmem [resolvable:$true] %s668
          %674 = dma.vmem_to_hbm [thread:$0]  %s669, 512, %s667, %s650, 256, 256, 16
        $region60: #{tpu_custom_call.1} parent=39 // pred_fallthru
          _
      $region40: #{tpu_custom_call.1} parent=5 // pred_fallthru
        _
      %p675 = scmp.le.s32.totalorder 2, %s16
      // Predicated region
      $region61: #{tpu_custom_call.1} parent=5 // pred_check
        %p676 = pneg %p675
      $region62: #{tpu_custom_call.1} parent=5 // pred_check_branch
        %678 = sbr.rel (%p676) target = $region64
      $region63: #{tpu_custom_call.1} parent=5 // pred_region
        %s679 = ssub.s32 %s16, 2
        // Predicated region
        $region65: #{tpu_custom_call.1} parent=63 // pred_check
          %p680 = pneg %p202
        $region66: #{tpu_custom_call.1} parent=63 // pred_check_branch
          %682 = sbr.rel (%p680) target = $region68
        $region67: #{tpu_custom_call.1} parent=63 // pred_region
          %s683 = sand.u32 %s187, 1
          %s684 = scalar_lea.sflag [#allocation5], %s683
          %s685 = sand.u32 %s187, 1
          %s686 = smul.addr %s685, 32
          %s687 = scalar_lea.vmem [#allocation9], %s686
          %688 = dma.done %s684, 512
        $region68: #{tpu_custom_call.1} parent=63 // pred_fallthru
          _
      $region64: #{tpu_custom_call.1} parent=5 // pred_fallthru
        _
    $region6: #{tpu_custom_call.1} parent=1 // loop_footer
      %s20 = sadd.s32 1, %s16
    $region7: #{tpu_custom_call.1} parent=1 // loop_footer_branch
      %15 = sbr.rel target = $region3
    $region8: #{tpu_custom_call.1} parent=1 // loop_exit
      _
    %689 = vsyncpa [#allocation4], 1
    %s690 = scalar_lea.sflag [#allocation4], 1
    %691 = vsyncpa %s690, 1
    %692 = vsyncpa [#allocation7], 1
    %693 = vsyncpa [#allocation5], 1
    %s694 = scalar_lea.sflag [#allocation5], 1
    %695 = vsyncpa %s694, 1

// kernel: tpu_custom_call.1
$region0: #{tpu_custom_call.1}
  #allocation0 [shape = 'u32[]', space=smem, size = 0x4, offset = 0x4, fixed_abs, tag = 'smem constant byte address 0x4 - core index']
  #allocation1 [shape = 'u32[144,128]{1,0:T(1,128)}', space=vmem, size = 0x12000, scoped, tag = 'internal scratch']
  #allocation2 [shape = 'bf16[16,128]{1,0:T(16,128)(2,1)}', space=vmem, size = 0x1000, scoped, tag = 'scratch operand']
  %s0 = inlined_call_operand.hbm [shape: bf16[16,128], index: 0, kind: input, shape index: {}]
  %s1 = inlined_call_operand.hbm [shape: bf16[4,128,128], index: 1, kind: input, shape index: {}]
  %s2 = inlined_call_operand.vmem [shape: f32[4,1,128], index: 2, kind: input, shape index: {}]
  %s3 = inlined_call_operand.hbm [shape: bf16[4,128,256], index: 3, kind: input, shape index: {}]
  %s4 = inlined_call_operand.vmem [shape: f32[4,1,256], index: 4, kind: input, shape index: {}]
  %s5 = inlined_call_operand.hbm [shape: f32[4,16,256], index: 5, kind: output, shape index: {}]
  %s6 = sld [smem:[#allocation0]]
  $region69: #{tpu_custom_call.1} parent=0
    _
  %s8 = ssub.s32 1, %s6
  %s9 = scalar_select 0, %s8, %s6
  $region1: #{tpu_custom_call.1} parent=0
    #allocation3 [shape = 'u8[4096]{0}', space=vmem, size = 0x1000, scoped, tag = 'input window, operand 0, single buffered']
    #allocation4 [shape = 's32[2]{0}', space=sflag, size = 0x8, scoped, tag = 'scoped memory for tpu_custom_call.1']
    #allocation5 [shape = 's32[2]{0}', space=sflag, size = 0x8, scoped, tag = 'scoped memory for tpu_custom_call.1']
    #allocation6 [shape = 'u8[65536]{0}', space=vmem, size = 0x10000, scoped, tag = 'input window, operand 1']
    #allocation7 [shape = 's32[2]{0}', space=sflag, size = 0x8, scoped, tag = 'scoped memory for tpu_custom_call.1']
    #allocation8 [shape = 'u8[131072]{0}', space=vmem, size = 0x20000, scoped, tag = 'input window, operand 3']
    #allocation9 [shape = 'u8[32768]{0}', space=vmem, size = 0x8000, scoped, tag = 'output window, operand 0']
    %10 = vsyncpa [#allocation4], 0
    %11 = vsyncpa [#allocation7], 0
    %s12 = scalar_lea.sflag [#allocation7], 1
    %13 = vsyncpa %s12, 0
    %14 = vsyncpa [#allocation5], 0
    %s15 = scalar_lea.sflag [#allocation5], 1
    %16 = vsyncpa %s15, 0
    loop: start=0, step=1, limit=6
    $region2: #{tpu_custom_call.1} parent=1 // loop_pre_header
      _
    $region3: #{tpu_custom_call.1} parent=1 // loop_header
      %s18 = sphi 0, %s22
      %p19 = scmp.ge.s32.totalorder %s18, 6
      %s25 = sphi 0, %s44
      %s26 = sphi 0, %s40
      %s27 = sphi 0, %s36
      %s28 = sphi 0, %s25
      %s29 = sphi 0, %s26
      %s30 = sphi 0, %s27
      %s31 = sphi 0, %s28
      %s32 = sphi 0, %s29
      %s33 = sphi 0, %s30
      %s47 = sphi 0, %s49
      %s50 = sphi 0, %s47
      %s51 = sphi 0, %s50
      %s67 = sphi 0, %s51
      %s73 = sphi 0, %s75
      %s76 = sphi 0, %s73
      %s77 = sphi 0, %s76
      %s93 = sphi 0, %s77
      %s99 = sphi 0, %s101
      %s102 = sphi 0, %s99
      %s103 = sphi 0, %s102
      %s119 = sphi 0, %s103
      %s127 = sphi 0, %s129
      %s130 = sphi 0, %s127
      %s131 = sphi 0, %s130
      %s147 = sphi 0, %s131
      %s155 = sphi 0, %s157
      %s158 = sphi 0, %s155
      %s159 = sphi 0, %s158
      %s175 = sphi 0, %s159
      %s185 = sphi 0, %s187
      %s188 = sphi 0, %s185
      %s189 = sphi 0, %s188
      %s205 = sphi 0, %s189
    $region4: #{tpu_custom_call.1} parent=1 // loop_header_branch
      %21 = sbr.rel (%p19) target = $region8
    $region5: #{tpu_custom_call.1} parent=1 // loop_body
      %s23 = ssub.s32 %s18, 1
      %s24 = ssub.s32 %s18, 2
      %s34 = sadd.s32 1, %s27
      %p35 = scmp.ge.s32.totalorder %s34, 1
      %s36 = scalar_select %p35, 0, %s34
      %s37 = sadd.s32 1, %s26
      %s38 = scalar_select %p35, %s37, %s26
      %p39 = scmp.ge.s32.totalorder %s38, 1
      %s40 = scalar_select %p39, 0, %s38
      %s41 = sadd.s32 1, %s25
      %s42 = scalar_select %p39, %s41, %s25
      %p43 = scmp.ge.s32.totalorder %s42, 4
      %s44 = scalar_select %p43, 0, %s42
      %s45 = ssub.s32 %s26, %s40
      %p46 = scmp.eq.s32.totalorder %s45, 0
      %s48 = sadd.s32 %s47, 1
      %s49 = scalar_select %p46, %s47, %s48
      %p52 = pneg %p46
      %p53 = scmp.eq.s32.totalorder %s18, 3
      %p54 = por %p52, %p53
      %p55 = scmp.ne.s32.totalorder %s47, %s50
      %p56 = scmp.eq.s32.totalorder %s18, 0
      %p57 = por %p55, %p56
      %p58 = scmp.ne.s32.totalorder %s47, %s50
      %p59 = scmp.eq.s32.totalorder %s23, 3
      %p60 = por %p58, %p59
      %p61 = scmp.ne.s32.totalorder %s50, %s51
      %p62 = scmp.eq.s32.totalorder %s23, 0
      %p63 = por %p61, %p62
      %p64 = scmp.ne.s32.totalorder %s50, %s51
      %p65 = scmp.eq.s32.totalorder %s24, 3
      %p66 = por %p64, %p65
      %p68 = scmp.ne.s32.totalorder %s51, %s67
      %p69 = scmp.eq.s32.totalorder %s24, 0
      %p70 = por %p68, %p69
      %s71 = ssub.s32 %s25, %s44
      %p72 = scmp.eq.s32.totalorder %s71, 0
      %s74 = sadd.s32 %s73, 1
      %s75 = scalar_select %p72, %s73, %s74
      %p78 = pneg %p72
      %p79 = scmp.eq.s32.totalorder %s18, 3
      %p80 = por %p78, %p79
      %p81 = scmp.ne.s32.totalorder %s73, %s76
      %p82 = scmp.eq.s32.totalorder %s18, 0
      %p83 = por %p81, %p82
      %p84 = scmp.ne.s32.totalorder %s73, %s76
      %p85 = scmp.eq.s32.totalorder %s23, 3
      %p86 = por %p84, %p85
      %p87 = scmp.ne.s32.totalorder %s76, %s77
      %p88 = scmp.eq.s32.totalorder %s23, 0
      %p89 = por %p87, %p88
      %p90 = scmp.ne.s32.totalorder %s76, %s77
      %p91 = scmp.eq.s32.totalorder %s24, 3
      %p92 = por %p90, %p91
      %p94 = scmp.ne.s32.totalorder %s77, %s93
      %p95 = scmp.eq.s32.totalorder %s24, 0
      %p96 = por %p94, %p95
      %s97 = ssub.s32 %s25, %s44
      %p98 = scmp.eq.s32.totalorder %s97, 0
      %s100 = sadd.s32 %s99, 1
      %s101 = scalar_select %p98, %s99, %s100
      %p104 = pneg %p98
      %p105 = scmp.eq.s32.totalorder %s18, 3
      %p106 = por %p104, %p105
      %p107 = scmp.ne.s32.totalorder %s99, %s102
      %p108 = scmp.eq.s32.totalorder %s18, 0
      %p109 = por %p107, %p108
      %p110 = scmp.ne.s32.totalorder %s99, %s102
      %p111 = scmp.eq.s32.totalorder %s23, 3
      %p112 = por %p110, %p111
      %p113 = scmp.ne.s32.totalorder %s102, %s103
      %p114 = scmp.eq.s32.totalorder %s23, 0
      %p115 = por %p113, %p114
      %p116 = scmp.ne.s32.totalorder %s102, %s103
      %p117 = scmp.eq.s32.totalorder %s24, 3
      %p118 = por %p116, %p117
      %p120 = scmp.ne.s32.totalorder %s103, %s119
      %p121 = scmp.eq.s32.totalorder %s24, 0
      %p122 = por %p120, %p121
      %s123 = ssub.s32 %s25, %s44
      %s124 = ssub.s32 %s27, %s36
      %s125 = sor.u32 %s123, %s124
      %p126 = scmp.eq.s32.totalorder %s125, 0
      %s128 = sadd.s32 %s127, 1
      %s129 = scalar_select %p126, %s127, %s128
      %p132 = pneg %p126
      %p133 = scmp.eq.s32.totalorder %s18, 3
      %p134 = por %p132, %p133
      %p135 = scmp.ne.s32.totalorder %s127, %s130
      %p136 = scmp.eq.s32.totalorder %s18, 0
      %p137 = por %p135, %p136
      %p138 = scmp.ne.s32.totalorder %s127, %s130
      %p139 = scmp.eq.s32.totalorder %s23, 3
      %p140 = por %p138, %p139
      %p141 = scmp.ne.s32.totalorder %s130, %s131
      %p142 = scmp.eq.s32.totalorder %s23, 0
      %p143 = por %p141, %p142
      %p144 = scmp.ne.s32.totalorder %s130, %s131
      %p145 = scmp.eq.s32.totalorder %s24, 3
      %p146 = por %p144, %p145
      %p148 = scmp.ne.s32.totalorder %s131, %s147
      %p149 = scmp.eq.s32.totalorder %s24, 0
      %p150 = por %p148, %p149
      %s151 = ssub.s32 %s25, %s44
      %s152 = ssub.s32 %s27, %s36
      %s153 = sor.u32 %s151, %s152
      %p154 = scmp.eq.s32.totalorder %s153, 0
      %s156 = sadd.s32 %s155, 1
      %s157 = scalar_select %p154, %s155, %s156
      %p160 = pneg %p154
      %p161 = scmp.eq.s32.totalorder %s18, 3
      %p162 = por %p160, %p161
      %p163 = scmp.ne.s32.totalorder %s155, %s158
      %p164 = scmp.eq.s32.totalorder %s18, 0
      %p165 = por %p163, %p164
      %p166 = scmp.ne.s32.totalorder %s155, %s158
      %p167 = scmp.eq.s32.totalorder %s23, 3
      %p168 = por %p166, %p167
      %p169 = scmp.ne.s32.totalorder %s158, %s159
      %p170 = scmp.eq.s32.totalorder %s23, 0
      %p171 = por %p169, %p170
      %p172 = scmp.ne.s32.totalorder %s158, %s159
      %p173 = scmp.eq.s32.totalorder %s24, 3
      %p174 = por %p172, %p173
      %p176 = scmp.ne.s32.totalorder %s159, %s175
      %p177 = scmp.eq.s32.totalorder %s24, 0
      %p178 = por %p176, %p177
      %s179 = ssub.s32 %s25, %s44
      %s180 = ssub.s32 %s26, %s40
      %s181 = sor.u32 %s179, %s180
      %s182 = ssub.s32 %s27, %s36
      %s183 = sor.u32 %s181, %s182
      %p184 = scmp.eq.s32.totalorder %s183, 0
      %s186 = sadd.s32 %s185, 1
      %s187 = scalar_select %p184, %s185, %s186
      %p190 = pneg %p184
      %p191 = scmp.eq.s32.totalorder %s18, 3
      %p192 = por %p190, %p191
      %p193 = scmp.ne.s32.totalorder %s185, %s188
      %p194 = scmp.eq.s32.totalorder %s18, 0
      %p195 = por %p193, %p194
      %p196 = scmp.ne.s32.totalorder %s185, %s188
      %p197 = scmp.eq.s32.totalorder %s23, 3
      %p198 = por %p196, %p197
      %p199 = scmp.ne.s32.totalorder %s188, %s189
      %p200 = scmp.eq.s32.totalorder %s23, 0
      %p201 = por %p199, %p200
      %p202 = scmp.ne.s32.totalorder %s188, %s189
      %p203 = scmp.eq.s32.totalorder %s24, 3
      %p204 = por %p202, %p203
      %p206 = scmp.ne.s32.totalorder %s189, %s205
      %p207 = scmp.eq.s32.totalorder %s24, 0
      %p208 = por %p206, %p207
      %p209 = scmp.le.s32.totalorder 1, %s18
      %p210 = scmp.lt.s32.totalorder %s18, 5
      %p211 = pnand %p209, %p210
      %p212 = pneg %p211
      // Predicated region
      $region9: #{tpu_custom_call.1} parent=5 // pred_check
        _
      $region10: #{tpu_custom_call.1} parent=5 // pred_check_branch
        %214 = sbr.rel (%p211) target = $region12
      $region11: #{tpu_custom_call.1} parent=5 // pred_region
        %s215 = ssub.s32 %s18, 1
        // Predicated region
        $region13: #{tpu_custom_call.1} parent=11 // pred_check
          %p216 = pneg %p63
        $region14: #{tpu_custom_call.1} parent=11 // pred_check_branch
          %218 = sbr.rel (%p216) target = $region16
        $region15: #{tpu_custom_call.1} parent=11 // pred_region
          %s219 = smul.u32 2, %s29
          %s221 = ssub.s32 128, 128
          %222 = vsyncadd [#allocation4], %s221
          %s223 = smul.addr %s219, 64
          %s224 = scalar_lea.hbm %s0, %s223
          %s225 = sshll.u32 [#allocation3], 4
          %s226 = int_to_ptr.vmem [resolvable:$true] %s225
          %231 = dma.hbm_to_vmem [thread:$0]  %s224, 128, %s226, [#allocation4], 64, 64, 4
        $region16: #{tpu_custom_call.1} parent=11 // pred_fallthru
          _
      $region12: #{tpu_custom_call.1} parent=5 // pred_fallthru
        _
      %p232 = scmp.lt.s32.totalorder %s18, 4
      // Predicated region
      $region17: #{tpu_custom_call.1} parent=5 // pred_check
        %p233 = pneg %p232
      $region18: #{tpu_custom_call.1} parent=5 // pred_check_branch
        %235 = sbr.rel (%p233) target = $region20
      $region19: #{tpu_custom_call.1} parent=5 // pred_region
        // Predicated region
        $region21: #{tpu_custom_call.1} parent=19 // pred_check
          %p236 = pneg %p83
        $region22: #{tpu_custom_call.1} parent=19 // pred_check_branch
          %238 = sbr.rel (%p236) target = $region24
        $region23: #{tpu_custom_call.1} parent=19 // pred_region
          %s239 = sand.u32 %s18, 1
          %s240 = scalar_lea.sflag [#allocation7], %s239
          %s241 = sand.u32 %s73, 1
          %s242 = smul.addr %s241, 64
          %s243 = scalar_lea.vmem [#allocation6], %s242
          %s245 = ssub.s32 1024, 1024
          %246 = vsyncadd %s240, %s245
          %s247 = smul.addr %s25, 16
          %s248 = smul.addr %s247, 64
          %s249 = scalar_lea.hbm %s1, %s248
          %s250 = sshll.u32 %s243, 4
          %s251 = int_to_ptr.vmem [resolvable:$true] %s250
          %256 = dma.hbm_to_vmem [thread:$0]  %s249, 1024, %s251, %s240, 64, 64, 4
        $region24: #{tpu_custom_call.1} parent=19 // pred_fallthru
          _
        // Predicated region
        $region25: #{tpu_custom_call.1} parent=19 // pred_check
          %p257 = pneg %p109
        $region26: #{tpu_custom_call.1} parent=19 // pred_check_branch
          %259 = sbr.rel (%p257) target = $region28
        $region27: #{tpu_custom_call.1} parent=19 // pred_region
          %p260 = scmp.lt.s32.totalorder %s25, 3
          %s261 = scalar_select %p260, %s25, 3
          %s262 = scalar_lea.vmem %s2, %s261
        $region28: #{tpu_custom_call.1} parent=19 // pred_fallthru
          _
        // Predicated region
        $region29: #{tpu_custom_call.1} parent=19 // pred_check
          %p263 = pneg %p137
        $region30: #{tpu_custom_call.1} parent=19 // pred_check_branch
          %265 = sbr.rel (%p263) target = $region32
        $region31: #{tpu_custom_call.1} parent=19 // pred_region
          %s266 = sand.u32 %s18, 1
          %s267 = scalar_lea.sflag [#allocation7], %s266
          %s268 = sand.u32 %s127, 1
          %s269 = smul.addr %s268, 128
          %s270 = scalar_lea.vmem [#allocation8], %s269
          %s271 = smul.u32 2, %s27
          %s273 = ssub.s32 2048, 2048
          %274 = vsyncadd %s267, %s273
          %s275 = smul.addr %s25, 32
          %s276 = sadd.s32 %s271, %s275
          %s277 = smul.addr %s276, 64
          %s278 = scalar_lea.hbm %s3, %s277
          %s279 = sshll.u32 %s270, 4
          %s280 = int_to_ptr.vmem [resolvable:$true] %s279
          %285 = dma.hbm_to_vmem [thread:$0]  %s278, 2048, %s280, %s267, 128, 128, 8
        $region32: #{tpu_custom_call.1} parent=19 // pred_fallthru
          _
        // Predicated region
        $region33: #{tpu_custom_call.1} parent=19 // pred_check
          %p286 = pneg %p165
        $region34: #{tpu_custom_call.1} parent=19 // pred_check_branch
          %288 = sbr.rel (%p286) target = $region36
        $region35: #{tpu_custom_call.1} parent=19 // pred_region
          %s289 = smul.u32 2, %s27
          %p290 = scmp.lt.s32.totalorder %s25, 3
          %s291 = scalar_select %p290, %s25, 3
          %p292 = scmp.lt.s32.totalorder %s289, 1
          %s293 = scalar_select %p292, %s289, 1
          %s294 = smul.addr %s291, 2
          %s295 = sadd.s32 %s293, %s294
          %s296 = scalar_lea.vmem %s4, %s295
          %s297 = smul.u32 2, %s27
        $region36: #{tpu_custom_call.1} parent=19 // pred_fallthru
          _
      $region20: #{tpu_custom_call.1} parent=5 // pred_fallthru
        _
      %p298 = scmp.le.s32.totalorder 1, %s18
      %p299 = scmp.lt.s32.totalorder %s18, 5
      %p300 = pnand %p298, %p299
      %p301 = pneg %p300
      // Predicated region
      $region37: #{tpu_custom_call.1} parent=5 // pred_check
        _
      $region38: #{tpu_custom_call.1} parent=5 // pred_check_branch
        %303 = sbr.rel (%p300) target = $region40
      $region39: #{tpu_custom_call.1} parent=5 // pred_region
        %s304 = ssub.s32 %s18, 1
        // Predicated region
        $region41: #{tpu_custom_call.1} parent=39 // pred_check
          %p305 = pneg %p63
        $region42: #{tpu_custom_call.1} parent=39 // pred_check_branch
          %307 = sbr.rel (%p305) target = $region44
        $region43: #{tpu_custom_call.1} parent=39 // pred_region
          %308 = dma.done [#allocation4], 128
        $region44: #{tpu_custom_call.1} parent=39 // pred_fallthru
          _
        %s309 = sand.u32 %s23, 1
        %s310 = scalar_lea.sflag [#allocation7], %s309
        %s311 = sand.u32 %s76, 1
        %s312 = smul.addr %s311, 64
        %s313 = scalar_lea.vmem [#allocation6], %s312
        // Predicated region
        $region45: #{tpu_custom_call.1} parent=39 // pred_check
          %p314 = pneg %p89
        $region46: #{tpu_custom_call.1} parent=39 // pred_check_branch
          %316 = sbr.rel (%p314) target = $region48
        $region47: #{tpu_custom_call.1} parent=39 // pred_region
          %317 = dma.done %s310, 1024
        $region48: #{tpu_custom_call.1} parent=39 // pred_fallthru
          _
        %s318 = sand.u32 %s23, 1
        %s319 = scalar_lea.sflag [#allocation7], %s318
        %s320 = sand.u32 %s130, 1
        %s321 = smul.addr %s320, 128
        %s322 = scalar_lea.vmem [#allocation8], %s321
        // Predicated region
        $region49: #{tpu_custom_call.1} parent=39 // pred_check
          %p323 = pneg %p143
        $region50: #{tpu_custom_call.1} parent=39 // pred_check_branch
          %325 = sbr.rel (%p323) target = $region52
        $region51: #{tpu_custom_call.1} parent=39 // pred_region
          %326 = dma.done %s319, 2048
        $region52: #{tpu_custom_call.1} parent=39 // pred_fallthru
          _
        %p327 = pneg %p63
        %p328 = pneg %p60
        %s329 = sand.u32 %s23, 1
        %s330 = scalar_lea.sflag [#allocation7], %s329
        %s331 = sand.u32 %s76, 1
        %s332 = smul.addr %s331, 64
        %s333 = scalar_lea.vmem [#allocation6], %s332
        %p334 = pneg %p89
        %p335 = pneg %p86
        %p336 = scmp.lt.s32.totalorder %s28, 3
        %s337 = scalar_select %p336, %s28, 3
        %s338 = scalar_lea.vmem %s2, %s337
        %p339 = pneg %p115
        %p340 = pneg %p112
        %s341 = sand.u32 %s23, 1
        %s342 = scalar_lea.sflag [#allocation7], %s341
        %s343 = sand.u32 %s130, 1
        %s344 = smul.addr %s343, 128
        %s345 = scalar_lea.vmem [#allocation8], %s344
        %p346 = pneg %p143
        %p347 = pneg %p140
        %s348 = smul.u32 2, %s30
        %p349 = scmp.lt.s32.totalorder %s28, 3
        %s350 = scalar_select %p349, %s28, 3
        %p351 = scmp.lt.s32.totalorder %s348, 1
        %s352 = scalar_select %p351, %s348, 1
        %s353 = smul.addr %s350, 2
        %s354 = sadd.s32 %s352, %s353
        %s355 = scalar_lea.vmem %s4, %s354
        %p356 = pneg %p171
        %p357 = pneg %p168
        %p358 = pneg %p201
        %p359 = pneg %p198
        %s360 = sand.u32 %s188, 1
        %s361 = scalar_lea.sflag [#allocation5], %s360
        %s362 = sand.u32 %s188, 1
        %s363 = smul.addr %s362, 32
        %s364 = scalar_lea.vmem [#allocation9], %s363
        %s365 = smul.u32 2, %s29
        %p366 = scmp.lt.s32.totalorder %s28, 3
        %s367 = scalar_select %p366, %s28, 3
        %s368 = scalar_lea.vmem %s2, %s367
        %s369 = smul.u32 2, %s30
        %s370 = smul.u32 2, %s30
        %p371 = scmp.lt.s32.totalorder %s28, 3
        %s372 = scalar_select %p371, %s28, 3
        %p373 = scmp.lt.s32.totalorder %s370, 1
        %s374 = scalar_select %p373, %s370, 1
        %s375 = smul.addr %s372, 2
        %s376 = sadd.s32 %s374, %s375
        %s377 = scalar_lea.vmem %s4, %s376
        %s378 = smul.u32 2, %s30
        %s379 = smul.u32 2, %s29
        %s380 = smul.u32 2, %s30
        %p382 = scmp.eq.s32.totalorder %s30, 0
        // Predicated region
        $region53: #{tpu_custom_call.1} parent=39 // pred_check
          %p383 = pneg %p382
        $region54: #{tpu_custom_call.1} parent=39 // pred_check_branch
          %385 = sbr.rel (%p383) target = $region56
        $region55: #{tpu_custom_call.1} parent=39 // pred_region
          %v386 = vld [vmem:[#allocation3] sm:$0xf]
          %v387 = vld [vmem:[#allocation3 + $0x4] sm:$0xf]
          %v388 = vld [vmem:[%s313] sm:$0xf]
          %v389 = vld [vmem:[%s313 + $0x4] sm:$0xf]
          %v390 = vld [vmem:[%s313 + $0x8] sm:$0xf]
          %v391 = vld [vmem:[%s313 + $0xc] sm:$0xf]
          %v392 = vld [vmem:[%s313 + $0x10] sm:$0xf]
          %v393 = vld [vmem:[%s313 + $0x14] sm:$0xf]
          %v394 = vld [vmem:[%s313 + $0x18] sm:$0xf]
          %v395 = vld [vmem:[%s313 + $0x1c] sm:$0xf]
          %v396 = vld [vmem:[%s313 + $0x20] sm:$0xf]
          %v397 = vld [vmem:[%s313 + $0x24] sm:$0xf]
          %v398 = vld [vmem:[%s313 + $0x28] sm:$0xf]
          %v399 = vld [vmem:[%s313 + $0x2c] sm:$0xf]
          %v400 = vld [vmem:[%s313 + $0x30] sm:$0xf]
          %v401 = vld [vmem:[%s313 + $0x34] sm:$0xf]
          %v402 = vld [vmem:[%s313 + $0x38] sm:$0xf]
          %v403 = vld [vmem:[%s313 + $0x3c] sm:$0xf]
          %v404 = vld [vmem:[%s368] sm:$0x1]
          %v406 = vlaneseq
          %v407 = vshrl.u32 %v406, 7
          %v408 = vsub.s32 0, %v407
          %v409 = vrot.slane %v404, %v408
          %v413 = vunpack.c.l.b16 %v386
          %v414 = vunpack.c.l.b16 %v387
          %v415 = vpack.c.b16 %v414, %v413
          %v433 = vunpack.c.l.b16 %v388
          %v434 = vunpack.c.l.b16 %v389
          %v435 = vunpack.c.l.b16 %v390
          %v436 = vunpack.c.l.b16 %v391
          %v437 = vunpack.c.l.b16 %v392
          %v438 = vunpack.c.l.b16 %v393
          %v439 = vunpack.c.l.b16 %v394
          %v440 = vunpack.c.l.b16 %v395
          %v441 = vunpack.c.l.b16 %v396
          %v442 = vunpack.c.l.b16 %v397
          %v443 = vunpack.c.l.b16 %v398
          %v444 = vunpack.c.l.b16 %v399
          %v445 = vunpack.c.l.b16 %v400
          %v446 = vunpack.c.l.b16 %v401
          %v447 = vunpack.c.l.b16 %v402
          %v448 = vunpack.c.l.b16 %v403
          %v449 = vpack.c.b16 %v434, %v433
          %v450 = vpack.c.b16 %v436, %v435
          %v451 = vpack.c.b16 %v438, %v437
          %v452 = vpack.c.b16 %v440, %v439
          %v453 = vpack.c.b16 %v442, %v441
          %v454 = vpack.c.b16 %v444, %v443
          %v455 = vpack.c.b16 %v446, %v445
          %v456 = vpack.c.b16 %v448, %v447
          %465 = vmatprep.subr.bf16.mxu0 0
          %466 = vmatpush1.bf16.msra.mxu0 %v449
          %467 = vmatprep.subr.bf16.mxu0 0
          %468 = vmatpush1.bf16.msra.mxu0 %v450
          %469 = vmatprep.subr.bf16.mxu0 0
          %470 = vmatpush1.bf16.msra.mxu0 %v451
          %471 = vmatprep.subr.bf16.mxu0 0
          %472 = vmatpush1.bf16.msra.mxu0 %v452
          %473 = vmatprep.subr.bf16.mxu0 0
          %474 = vmatpush1.bf16.msra.mxu0 %v453
          %475 = vmatprep.subr.bf16.mxu0 0
          %476 = vmatpush1.bf16.msra.mxu0 %v454
          %477 = vmatprep.subr.bf16.mxu0 0
          %478 = vmatpush1.bf16.msra.mxu0 %v455
          %479 = vmatprep.subr.bf16.mxu0 0
          %480 = vmatpush1.bf16.msra.mxu0 %v456
          %481 = vmatprep.subr.bf16.mxu0 0
          %482 = vmatpush1.bf16.msra.mxu0 0
          %483 = vmatprep.subr.bf16.mxu0 0
          %484 = vmatpush1.bf16.msra.mxu0 0
          %485 = vmatprep.subr.bf16.mxu0 0
          %486 = vmatpush1.bf16.msra.mxu0 0
          %487 = vmatprep.subr.bf16.mxu0 0
          %488 = vmatpush1.bf16.msra.mxu0 0
          %489 = vmatprep.subr.bf16.mxu0 0
          %490 = vmatpush1.bf16.msra.mxu0 0
          %491 = vmatprep.subr.bf16.mxu0 0
          %492 = vmatpush1.bf16.msra.mxu0 0
          %493 = vmatprep.subr.bf16.mxu0 0
          %494 = vmatpush1.bf16.msra.mxu0 0
          %495 = vmatprep.subr.bf16.mxu0 0
          %496 = vmatpush1.bf16.msra.mxu0 0
          %497 = vmatprep.mubr.bf16.mxu0 0
          %498 = vmatmul.mubr.bf16.gmra.mrb[0].mxu0 %v415
          %v499 = vpop.f32.mrb[0].mxu0
          %v500 = vadd.f32 %v409, %v499
          %v501 = vpop.f32.mrb[0].mxu0
          %v502 = vpop.f32.mrb[0].mxu0
          %v503 = vadd.f32 %v409, %v502
          %v504 = vpop.f32.mrb[0].mxu0
          %505 = vdwg.mxu0
          %v506 = vmax.f32 %v500, 0.0
          %v507 = vmax.f32 %v503, 0.0
          %v508 = vpack.c.bf16 %v507, %v506
          %509 = vst [vmem:[#allocation2] sm:$0xff] %v508
        $region56: #{tpu_custom_call.1} parent=39 // pred_fallthru
          _
        %v510 = vld [vmem:[#allocation2] sm:$0xff]
        %v511 = vld [vmem:[%s322] sm:$0xff]
        %v512 = vld [vmem:[%s322 + $0x8] sm:$0xff]
        %v513 = vld [vmem:[%s322 + $0x10] sm:$0xff]
        %v514 = vld [vmem:[%s322 + $0x18] sm:$0xff]
        %v515 = vld [vmem:[%s322 + $0x20] sm:$0xff]
        %v516 = vld [vmem:[%s322 + $0x28] sm:$0xff]
        %v517 = vld [vmem:[%s322 + $0x30] sm:$0xff]
        %v518 = vld [vmem:[%s322 + $0x38] sm:$0xff]
        %v519 = vld [vmem:[%s322 + $0x40] sm:$0xff]
        %v520 = vld [vmem:[%s322 + $0x48] sm:$0xff]
        %v521 = vld [vmem:[%s322 + $0x50] sm:$0xff]
        %v522 = vld [vmem:[%s322 + $0x58] sm:$0xff]
        %v523 = vld [vmem:[%s322 + $0x60] sm:$0xff]
        %v524 = vld [vmem:[%s322 + $0x68] sm:$0xff]
        %v525 = vld [vmem:[%s322 + $0x70] sm:$0xff]
        %v526 = vld [vmem:[%s322 + $0x78] sm:$0xff]
        %v527 = vld [vmem:[%s377] sm:$0x3]
        %v529 = vlaneseq
        %v530 = vshrl.u32 %v529, 7
        %v531 = vsub.s32 0, %v530
        %v532 = vrot.slane %v527, %v531
        %v533 = vlaneseq
        %v534 = vshrl.u32 %v533, 7
        %v535 = vsub.s32 1, %v534
        %v536 = vrot.slane %v527, %v535
        %v555 = vunpack.c.l.b16 %v511
        %v556 = vunpack.c.h.b16 %v511
        %v557 = vunpack.c.l.b16 %v512
        %v558 = vunpack.c.h.b16 %v512
        %v559 = vunpack.c.l.b16 %v513
        %v560 = vunpack.c.h.b16 %v513
        %v561 = vunpack.c.l.b16 %v514
        %v562 = vunpack.c.h.b16 %v514
        %v563 = vunpack.c.l.b16 %v515
        %v564 = vunpack.c.h.b16 %v515
        %v565 = vunpack.c.l.b16 %v516
        %v566 = vunpack.c.h.b16 %v516
        %v567 = vunpack.c.l.b16 %v517
        %v568 = vunpack.c.h.b16 %v517
        %v569 = vunpack.c.l.b16 %v518
        %v570 = vunpack.c.h.b16 %v518
        %v571 = vunpack.c.l.b16 %v519
        %v572 = vunpack.c.h.b16 %v519
        %v573 = vunpack.c.l.b16 %v520
        %v574 = vunpack.c.h.b16 %v520
        %v575 = vunpack.c.l.b16 %v521
        %v576 = vunpack.c.h.b16 %v521
        %v577 = vunpack.c.l.b16 %v522
        %v578 = vunpack.c.h.b16 %v522
        %v579 = vunpack.c.l.b16 %v523
        %v580 = vunpack.c.h.b16 %v523
        %v581 = vunpack.c.l.b16 %v524
        %v582 = vunpack.c.h.b16 %v524
        %v583 = vunpack.c.l.b16 %v525
        %v584 = vunpack.c.h.b16 %v525
        %v585 = vunpack.c.l.b16 %v526
        %v586 = vunpack.c.h.b16 %v526
        %v587 = vpack.c.b16 %v557, %v555
        %v588 = vpack.c.b16 %v558, %v556
        %v589 = vpack.c.b16 %v561, %v559
        %v590 = vpack.c.b16 %v562, %v560
        %v591 = vpack.c.b16 %v565, %v563
        %v592 = vpack.c.b16 %v566, %v564
        %v593 = vpack.c.b16 %v569, %v567
        %v594 = vpack.c.b16 %v570, %v568
        %v595 = vpack.c.b16 %v573, %v571
        %v596 = vpack.c.b16 %v574, %v572
        %v597 = vpack.c.b16 %v577, %v575
        %v598 = vpack.c.b16 %v578, %v576
        %v599 = vpack.c.b16 %v581, %v579
        %v600 = vpack.c.b16 %v582, %v580
        %v601 = vpack.c.b16 %v585, %v583
        %v602 = vpack.c.b16 %v586, %v584
        %619 = vmatprep.subr.bf16.mxu0 %v588
        %620 = vmatpush1.bf16.msra.mxu0 %v587
        %621 = vmatprep.subr.bf16.mxu0 %v590
        %622 = vmatpush1.bf16.msra.mxu0 %v589
        %623 = vmatprep.subr.bf16.mxu0 %v592
        %624 = vmatpush1.bf16.msra.mxu0 %v591
        %625 = vmatprep.subr.bf16.mxu0 %v594
        %626 = vmatpush1.bf16.msra.mxu0 %v593
        %627 = vmatprep.subr.bf16.mxu0 %v596
        %628 = vmatpush1.bf16.msra.mxu0 %v595
        %629 = vmatprep.subr.bf16.mxu0 %v598
        %630 = vmatpush1.bf16.msra.mxu0 %v597
        %631 = vmatprep.subr.bf16.mxu0 %v600
        %632 = vmatpush1.bf16.msra.mxu0 %v599
        %633 = vmatprep.subr.bf16.mxu0 %v602
        %634 = vmatpush1.bf16.msra.mxu0 %v601
        %635 = vmatprep.subr.bf16.mxu0 0
        %636 = vmatpush1.bf16.msra.mxu0 0
        %637 = vmatprep.subr.bf16.mxu0 0
        %638 = vmatpush1.bf16.msra.mxu0 0
        %639 = vmatprep.subr.bf16.mxu0 0
        %640 = vmatpush1.bf16.msra.mxu0 0
        %641 = vmatprep.subr.bf16.mxu0 0
        %642 = vmatpush1.bf16.msra.mxu0 0
        %643 = vmatprep.subr.bf16.mxu0 0
        %644 = vmatpush1.bf16.msra.mxu0 0
        %645 = vmatprep.subr.bf16.mxu0 0
        %646 = vmatpush1.bf16.msra.mxu0 0
        %647 = vmatprep.subr.bf16.mxu0 0
        %648 = vmatpush1.bf16.msra.mxu0 0
        %649 = vmatprep.subr.bf16.mxu0 0
        %650 = vmatpush1.bf16.msra.mxu0 0
        %651 = vmatprep.mubr.bf16.mxu0 0
        %652 = vmatmul.mubr.bf16.gmra.mrb[0].mxu0 %v510
        %v653 = vpop.f32.mrb[0].mxu0
        %v654 = vadd.f32 %v532, %v653
        %v655 = vpop.f32.mrb[0].mxu0
        %v656 = vadd.f32 %v536, %v655
        %v657 = vpop.f32.mrb[0].mxu0
        %v658 = vadd.f32 %v532, %v657
        %v659 = vpop.f32.mrb[0].mxu0
        %v660 = vadd.f32 %v536, %v659
        %661 = vdwg.mxu0
        %662 = vst [vmem:[%s364] sm:$0xff] %v654
        %663 = vst [vmem:[%s364 + $0x8] sm:$0xff] %v656
        %664 = vst [vmem:[%s364 + $0x10] sm:$0xff] %v658
        %665 = vst [vmem:[%s364 + $0x18] sm:$0xff] %v660
        %s666 = sand.u32 %s188, 1
        %s667 = scalar_lea.sflag [#allocation5], %s666
        %s668 = sand.u32 %s188, 1
        %s669 = smul.addr %s668, 32
        %s670 = scalar_lea.vmem [#allocation9], %s669
        // Predicated region
        $region57: #{tpu_custom_call.1} parent=39 // pred_check
          %p671 = pneg %p198
        $region58: #{tpu_custom_call.1} parent=39 // pred_check_branch
          %673 = sbr.rel (%p671) target = $region60
        $region59: #{tpu_custom_call.1} parent=39 // pred_region
          %s674 = smul.u32 2, %s29
          %s675 = smul.u32 2, %s30
          %s677 = ssub.s32 512, 512
          %678 = vsyncadd %s667, %s677
          %s679 = smul.addr %s674, 2
          %s680 = sadd.s32 %s675, %s679
          %s681 = smul.addr %s28, 4
          %s682 = sadd.s32 %s680, %s681
          %s683 = smul.addr %s682, 128
          %s684 = scalar_lea.hbm %s5, %s683
          %s685 = sshll.u32 %s670, 4
          %s686 = int_to_ptr.vmem [resolvable:$true] %s685
          %691 = dma.vmem_to_hbm [thread:$0]  %s686, 512, %s684, %s667, 256, 256, 16
        $region60: #{tpu_custom_call.1} parent=39 // pred_fallthru
          _
      $region40: #{tpu_custom_call.1} parent=5 // pred_fallthru
        _
      %p692 = scmp.le.s32.totalorder 2, %s18
      // Predicated region
      $region61: #{tpu_custom_call.1} parent=5 // pred_check
        %p693 = pneg %p692
      $region62: #{tpu_custom_call.1} parent=5 // pred_check_branch
        %695 = sbr.rel (%p693) target = $region64
      $region63: #{tpu_custom_call.1} parent=5 // pred_region
        %s696 = ssub.s32 %s18, 2
        // Predicated region
        $region65: #{tpu_custom_call.1} parent=63 // pred_check
          %p697 = pneg %p204
        $region66: #{tpu_custom_call.1} parent=63 // pred_check_branch
          %699 = sbr.rel (%p697) target = $region68
        $region67: #{tpu_custom_call.1} parent=63 // pred_region
          %s700 = sand.u32 %s189, 1
          %s701 = scalar_lea.sflag [#allocation5], %s700
          %s702 = sand.u32 %s189, 1
          %s703 = smul.addr %s702, 32
          %s704 = scalar_lea.vmem [#allocation9], %s703
          %705 = dma.done %s701, 512
        $region68: #{tpu_custom_call.1} parent=63 // pred_fallthru
          _
      $region64: #{tpu_custom_call.1} parent=5 // pred_fallthru
        _
    $region6: #{tpu_custom_call.1} parent=1 // loop_footer
      %s22 = sadd.s32 1, %s18
    $region7: #{tpu_custom_call.1} parent=1 // loop_footer_branch
      %17 = sbr.rel target = $region3
    $region8: #{tpu_custom_call.1} parent=1 // loop_exit
      _
    %706 = vsyncpa [#allocation4], 1
    %s707 = scalar_lea.sflag [#allocation4], 1
    %708 = vsyncpa %s707, 1
    %709 = vsyncpa [#allocation7], 1
    %s710 = scalar_lea.sflag [#allocation7], 1
    %711 = vsyncpa %s710, 1
    %712 = vsyncpa [#allocation5], 1
    %s713 = scalar_lea.sflag [#allocation5], 1
    %714 = vsyncpa %s713, 1

</llo_original>
